<compile_context>
chip_gen: v6e
topology: v6e:2x2x1
jax: 0.10.0
libtpu: 0.0.40
codegen_flags: <defaults>
</compile_context>

<pallas_src>
import functools
import math

import jax
import jax.numpy as jnp
from jax.experimental import pallas as pl
from jax.experimental.pallas import tpu as pltpu


def agc_kernel(B, N, B_pad,
               gx_ref, xth_ref, wih_ref, whh_ref, bih_ref, bhh_ref,
               wk_ref, wq_ref,
               out_ref,
               ig_ref):
    f32 = jnp.float32
    bf16 = jnp.bfloat16
    H = N                      # GRU hidden size == num_nodes

    # ---- GRU input projection: one bf16 MXU matmul for all (step, batch) rows,
    #      parked in VMEM scratch so its vregs are not live across the recurrence.
    ig_ref[...] = jnp.dot(gx_ref[...], wih_ref[...],
                          preferred_element_type=f32) + bih_ref[...]   # (N*B_pad, 3H)

    whh = whh_ref[...]          # (H, 3H) bf16, loaded once outside the loop
    bhh = bhh_ref[...]          # (1, 3H) f32

    # ---- GRU over the node sequence (inherently serial, 16 dependent steps) ----
    def step(s, carry):
        h, key_acc, query_acc = carry
        row = pl.multiple_of(s * B_pad, B_pad)
        ig = ig_ref[pl.ds(row, B_pad), :]                               # (B_pad, 3H)
        hg = jnp.dot(h.astype(bf16), whh,
                     preferred_element_type=f32) + bhh                 # (B_pad, 3H)
        # r and z fused into a single sigmoid dispatch.
        rz = jax.nn.sigmoid(ig[:, :2 * H] + hg[:, :2 * H])
        r = rz[:, :H]
        z = rz[:, H:]
        n = jnp.tanh(ig[:, 2 * H:] + r * hg[:, 2 * H:])
        h = (1.0 - z) * n + z * h
        # attention key/query accumulated on the fly (scalar weights from SMEM)
        key_acc = key_acc + wk_ref[s] * h
        query_acc = query_acc + wq_ref[s] * h
        return h, key_acc, query_acc

    zeros = jnp.zeros((B_pad, H), f32)
    _, key_acc, query_acc = jax.lax.fori_loop(
        0, N, step, (zeros, zeros, zeros), unroll=True)

    # ---- self graph attention -> learned adjacency (padded batch rows dropped) --
    kq = key_acc[:B]                                                    # (B, H)
    qq = query_acc[:B]                                                  # (B, H)
    d = kq[:, :, None] + qq[:, None, :]                                 # (B, N, N)
    d = jnp.where(d >= 0.0, d, 0.01 * d)                                # leaky_relu
    m = jnp.max(d, axis=-1, keepdims=True)
    e = jnp.exp(d - m)
    att3 = e / jnp.sum(e, axis=-1, keepdims=True)                       # softmax_j
    att = att3[0]
    for b in range(1, B):                                               # B tiny & static
        att = att + att3[b]
    att = att * (1.0 / B)
    adj = 0.5 * (att + att.T)                                           # (N, N)

    # ---- graph conv: th already folded into xth -> one matmul, one dense store --
    out_ref[...] = jnp.dot(adj.astype(bf16), xth_ref[...],
                           preferred_element_type=f32)                  # (N, Cout*B*T)


@jax.jit
def agc_forward(x, params):
    B, T, N, Cin = x.shape
    Cout = params["th"].shape[1]
    H = N
    B_pad = max(8, -(-B // 8) * 8)            # pad batch to a full sublane tile
    f32, bf16 = jnp.float32, jnp.bfloat16

    # Host-side layout glue (jitted together with the pallas_call).
    # GRU input: rows (seq step s, padded batch b), lanes = T = 12. Pad rows are 0.
    seq = jnp.transpose(x[:, :, :, 0], (2, 0, 1)).astype(f32)           # (N, B, T)
    seq = jnp.pad(seq, ((0, 0), (0, B_pad - B), (0, 0)))
    gx = seq.reshape(N * B_pad, T).astype(bf16)

    # Fold th into the data slab before the adjacency matmul:
    #   xth[j, (o, b, t)] = sum_c x[b, t, j, c] * th[c, o]
    xth = jnp.einsum("btjc,co->jobt", x.astype(f32), params["th"].astype(f32))
    xth = xth.reshape(N, Cout * B * T).astype(bf16)

    inputs = (
        gx, xth,
        params["w_ih"].T.astype(bf16),                 # (T, 3H)
        params["w_hh"].T.astype(bf16),                 # (H, 3H)
        params["b_ih"].reshape(1, 3 * H).astype(f32),
        params["b_hh"].reshape(1, 3 * H).astype(f32),
        params["wk"].reshape(N).astype(f32),           # SMEM scalars
        params["wq"].reshape(N).astype(f32),           # SMEM scalars
    )
    vmem = pl.BlockSpec(memory_space=pltpu.MemorySpace.VMEM)
    smem = pl.BlockSpec(memory_space=pltpu.MemorySpace.SMEM)

    kernel = functools.partial(agc_kernel, B, N, B_pad)
    out_slab = pl.pallas_call(
        kernel,
        out_shape=jax.ShapeDtypeStruct((N, Cout * B * T), f32),
        in_specs=[vmem, vmem, vmem, vmem, vmem, vmem, smem, smem],
        out_specs=vmem,
        scratch_shapes=[pltpu.VMEM((N * B_pad, 3 * H), f32)],
    )(*inputs)

    # (N, Cout*B*T) with columns (o, b, t)  ->  (B, T, N, Cout)
    return jnp.transpose(out_slab.reshape(N, Cout, B, T), (2, 3, 0, 1))


def reference_forward(x, params):
    """Pure-JAX replica of the PyTorch AGC forward (for verification)."""
    B, T, N, Cin = x.shape
    H = N
    wih, whh = params["w_ih"], params["w_hh"]
    bih, bhh = params["b_ih"], params["b_hh"]

    seq = jnp.transpose(x[:, :, :, 0], (2, 0, 1))         # (N, B, T)

    def step(h, xt):
        gi = xt @ wih.T + bih
        gh = h @ whh.T + bhh
        r = jax.nn.sigmoid(gi[:, :H] + gh[:, :H])
        z = jax.nn.sigmoid(gi[:, H:2 * H] + gh[:, H:2 * H])
        n = jnp.tanh(gi[:, 2 * H:] + r * gh[:, 2 * H:])
        hn = (1.0 - z) * n + z * h
        return hn, hn

    _, hs = jax.lax.scan(step, jnp.zeros((B, H), jnp.float32), seq)   # (N, B, H)
    g = jnp.transpose(hs, (1, 2, 0))                      # (B, H, N_seq)
    key = g @ params["wk"]                                # (B, H, 1)
    query = g @ params["wq"]                              # (B, H, 1)
    data = key + jnp.transpose(query, (0, 2, 1))          # (B, H, N)
    data = jnp.where(data >= 0.0, data, 0.01 * data)      # leaky_relu
    att = jax.nn.softmax(data, axis=2)
    att = jnp.mean(att, axis=0)
    adj = 0.5 * (att + att.T)

    out = jnp.einsum("ij,btjc->bitc", adj, x)
    out = jnp.einsum("bitc,co->bito", out, params["th"])
    return jnp.transpose(out, (0, 2, 1, 3))               # (B, T, N, Cout)


def init_params(key, T, N, Cin, Cout):
    H = N
    ks = jax.random.split(key, 7)
    k_gru = 1.0 / math.sqrt(H)
    std_th = 1.0 / math.sqrt(Cout)

    def u(k, shape, a):
        return jax.random.uniform(k, shape, jnp.float32, minval=-a, maxval=a)

    return {
        "w_ih": u(ks[0], (3 * H, T), k_gru),
        "w_hh": u(ks[1], (3 * H, H), k_gru),
        "b_ih": u(ks[2], (3 * H,), k_gru),
        "b_hh": u(ks[3], (3 * H,), k_gru),
        "wk": jax.random.uniform(ks[4], (N, 1), jnp.float32),   # torch.rand init
        "wq": jax.random.uniform(ks[5], (N, 1), jnp.float32),   # torch.rand init
        "th": u(ks[6], (Cin, Cout), std_th),
    }


if __name__ == "__main__":
    B, T, N = 2, 12, 16            # T=12 is forced by nn.GRU(12, num_nodes)
    Cin, Cout = 4, 8

    key = jax.random.PRNGKey(0)
    kx, kp = jax.random.split(key)
    x = jax.random.normal(kx, (B, T, N, Cin), jnp.float32)
    params = init_params(kp, T, N, Cin, Cout)

    out = jax.block_until_ready(agc_forward(x, params))
    ref = reference_forward(x, params)

    assert out.shape == (B, T, N, Cout)
    assert bool(jnp.all(jnp.isfinite(out)))
    err = float(jnp.max(jnp.abs(out - ref)))
    scale = float(jnp.max(jnp.abs(ref)))
    # bf16 MXU operands (per perf review) -> relative error budget vs f32 ref.
    assert err <= 5e-3 + 5e-2 * scale, (err, scale)

    print("KERNEL_OK")
</pallas_src>

<mosaic_0001>
module attributes {stable_mosaic.version = 11 : i64} {
  func.func @agc_kernel(%arg0: memref<128x12xbf16, #tpu.memory_space<vmem>>, %arg1: memref<16x192xbf16, #tpu.memory_space<vmem>>, %arg2: memref<12x48xbf16, #tpu.memory_space<vmem>>, %arg3: memref<16x48xbf16, #tpu.memory_space<vmem>>, %arg4: memref<1x48xf32, #tpu.memory_space<vmem>>, %arg5: memref<1x48xf32, #tpu.memory_space<vmem>>, %arg6: memref<16xf32, #tpu.memory_space<smem>>, %arg7: memref<16xf32, #tpu.memory_space<smem>>, %arg8: memref<16x192xf32, #tpu.memory_space<vmem>>, %arg9: memref<128x48xf32, #tpu.memory_space<vmem>>) attributes {dimension_semantics = [], scalar_prefetch = 0 : i64, scratch_operands = 1 : i64, tpu.core_type = #tpu.core_type<tc>} {
    %c0 = arith.constant 0 : index
    %c0_0 = arith.constant 0 : index
    %0 = vector.load %arg0[%c0, %c0_0] : memref<128x12xbf16, #tpu.memory_space<vmem>>, vector<128x12xbf16>
    %c0_1 = arith.constant 0 : index
    %c0_2 = arith.constant 0 : index
    %1 = vector.load %arg2[%c0_1, %c0_2] : memref<12x48xbf16, #tpu.memory_space<vmem>>, vector<12x48xbf16>
    %cst = arith.constant dense<0.000000e+00> : vector<128x48xf32>
    %2 = tpu.matmul %0, %1, %cst {dimension_numbers = #tpu.dot_dimension_numbers<[1], [0], [0], [1], [0, 0, 1, 1], [], []>} : vector<128x12xbf16>, vector<12x48xbf16>, vector<128x48xf32> -> vector<128x48xf32>
    %c0_3 = arith.constant 0 : index
    %c0_4 = arith.constant 0 : index
    %3 = vector.load %arg4[%c0_3, %c0_4] : memref<1x48xf32, #tpu.memory_space<vmem>>, vector<1x48xf32>
    %4 = vector.broadcast %3 : vector<1x48xf32> to vector<128x48xf32>
    %5 = arith.addf %2, %4 : vector<128x48xf32>
    %c0_5 = arith.constant 0 : index
    %c0_6 = arith.constant 0 : index
    %6 = vector.load %arg9[%c0_5, %c0_6] : memref<128x48xf32, #tpu.memory_space<vmem>>, vector<128x48xf32>
    tpu.vector_store %arg9[%c0_5, %c0_6], %5 {strides = array<i32>} : memref<128x48xf32, #tpu.memory_space<vmem>>, vector<128x48xf32>,
    %c0_7 = arith.constant 0 : index
    %c0_8 = arith.constant 0 : index
    %7 = vector.load %arg3[%c0_7, %c0_8] : memref<16x48xbf16, #tpu.memory_space<vmem>>, vector<16x48xbf16>
    %c0_9 = arith.constant 0 : index
    %c0_10 = arith.constant 0 : index
    %8 = vector.load %arg5[%c0_9, %c0_10] : memref<1x48xf32, #tpu.memory_space<vmem>>, vector<1x48xf32>
    %cst_11 = arith.constant 0.000000e+00 : f32
    %9 = vector.broadcast %cst_11 : f32 to vector<8x16xf32>
    %c0_i32 = arith.constant 0 : i32
    %c8_i32 = arith.constant 8 : i32
    %10 = arith.muli %c0_i32, %c8_i32 : i32
    %11 = tpu.assume_multiple %10, 8 : i32
    %12 = arith.index_cast %11 : i32 to index
    %c0_12 = arith.constant 0 : index
    %13 = vector.load %arg9[%12, %c0_12] : memref<128x48xf32, #tpu.memory_space<vmem>>, vector<8x48xf32>
    %14 = arith.truncf %9 : vector<8x16xf32> to vector<8x16xbf16>
    %cst_13 = arith.constant dense<0.000000e+00> : vector<8x48xf32>
    %15 = tpu.matmul %14, %7, %cst_13 {dimension_numbers = #tpu.dot_dimension_numbers<[1], [0], [0], [1], [0, 0, 1, 1], [], []>} : vector<8x16xbf16>, vector<16x48xbf16>, vector<8x48xf32> -> vector<8x48xf32>
    %16 = vector.broadcast %8 : vector<1x48xf32> to vector<8x48xf32>
    %17 = arith.addf %15, %16 : vector<8x48xf32>
    %18 = vector.extract_strided_slice %13 {offsets = [0, 0], sizes = [8, 32], strides = [1, 1]} : vector<8x48xf32> to vector<8x32xf32>
    %19 = vector.extract_strided_slice %17 {offsets = [0, 0], sizes = [8, 32], strides = [1, 1]} : vector<8x48xf32> to vector<8x32xf32>
    %20 = arith.addf %18, %19 : vector<8x32xf32>
    %21 = arith.negf %20 : vector<8x32xf32>
    %22 = math.exp %21 : vector<8x32xf32>
    %cst_14 = arith.constant 1.000000e+00 : f32
    %23 = vector.broadcast %cst_14 : f32 to vector<8x32xf32>
    %24 = arith.addf %23, %22 : vector<8x32xf32>
    %25 = arith.divf %23, %24 : vector<8x32xf32>
    %26 = vector.extract_strided_slice %25 {offsets = [0, 0], sizes = [8, 16], strides = [1, 1]} : vector<8x32xf32> to vector<8x16xf32>
    %27 = vector.extract_strided_slice %25 {offsets = [0, 16], sizes = [8, 16], strides = [1, 1]} : vector<8x32xf32> to vector<8x16xf32>
    %28 = vector.extract_strided_slice %13 {offsets = [0, 32], sizes = [8, 16], strides = [1, 1]} : vector<8x48xf32> to vector<8x16xf32>
    %29 = vector.extract_strided_slice %17 {offsets = [0, 32], sizes = [8, 16], strides = [1, 1]} : vector<8x48xf32> to vector<8x16xf32>
    %30 = arith.mulf %26, %29 : vector<8x16xf32>
    %31 = arith.addf %28, %30 : vector<8x16xf32>
    %32 = math.tanh %31 : vector<8x16xf32>
    %cst_15 = arith.constant 1.000000e+00 : f32
    %33 = vector.broadcast %cst_15 : f32 to vector<8x16xf32>
    %34 = arith.subf %33, %27 : vector<8x16xf32>
    %35 = arith.mulf %34, %32 : vector<8x16xf32>
    %36 = arith.mulf %27, %9 : vector<8x16xf32>
    %37 = arith.addf %35, %36 : vector<8x16xf32>
    %38 = arith.index_cast %c0_i32 : i32 to index
    %39 = memref.load %arg6[%38] : memref<16xf32, #tpu.memory_space<smem>>
    %40 = vector.broadcast %39 : f32 to vector<8x16xf32>
    %41 = arith.mulf %40, %37 : vector<8x16xf32>
    %42 = arith.addf %9, %41 : vector<8x16xf32>
    %43 = arith.index_cast %c0_i32 : i32 to index
    %44 = memref.load %arg7[%43] : memref<16xf32, #tpu.memory_space<smem>>
    %45 = vector.broadcast %44 : f32 to vector<8x16xf32>
    %46 = arith.mulf %45, %37 : vector<8x16xf32>
    %47 = arith.addf %9, %46 : vector<8x16xf32>
    %c1_i32 = arith.constant 1 : i32
    %c8_i32_16 = arith.constant 8 : i32
    %48 = arith.muli %c1_i32, %c8_i32_16 : i32
    %49 = tpu.assume_multiple %48, 8 : i32
    %50 = arith.index_cast %49 : i32 to index
    %c0_17 = arith.constant 0 : index
    %51 = vector.load %arg9[%50, %c0_17] : memref<128x48xf32, #tpu.memory_space<vmem>>, vector<8x48xf32>
    %52 = arith.truncf %37 : vector<8x16xf32> to vector<8x16xbf16>
    %cst_18 = arith.constant dense<0.000000e+00> : vector<8x48xf32>
    %53 = tpu.matmul %52, %7, %cst_18 {dimension_numbers = #tpu.dot_dimension_numbers<[1], [0], [0], [1], [0, 0, 1, 1], [], []>} : vector<8x16xbf16>, vector<16x48xbf16>, vector<8x48xf32> -> vector<8x48xf32>
    %54 = vector.broadcast %8 : vector<1x48xf32> to vector<8x48xf32>
    %55 = arith.addf %53, %54 : vector<8x48xf32>
    %56 = vector.extract_strided_slice %51 {offsets = [0, 0], sizes = [8, 32], strides = [1, 1]} : vector<8x48xf32> to vector<8x32xf32>
    %57 = vector.extract_strided_slice %55 {offsets = [0, 0], sizes = [8, 32], strides = [1, 1]} : vector<8x48xf32> to vector<8x32xf32>
    %58 = arith.addf %56, %57 : vector<8x32xf32>
    %59 = arith.negf %58 : vector<8x32xf32>
    %60 = math.exp %59 : vector<8x32xf32>
    %cst_19 = arith.constant 1.000000e+00 : f32
    %61 = vector.broadcast %cst_19 : f32 to vector<8x32xf32>
    %62 = arith.addf %61, %60 : vector<8x32xf32>
    %63 = arith.divf %61, %62 : vector<8x32xf32>
    %64 = vector.extract_strided_slice %63 {offsets = [0, 0], sizes = [8, 16], strides = [1, 1]} : vector<8x32xf32> to vector<8x16xf32>
    %65 = vector.extract_strided_slice %63 {offsets = [0, 16], sizes = [8, 16], strides = [1, 1]} : vector<8x32xf32> to vector<8x16xf32>
    %66 = vector.extract_strided_slice %51 {offsets = [0, 32], sizes = [8, 16], strides = [1, 1]} : vector<8x48xf32> to vector<8x16xf32>
    %67 = vector.extract_strided_slice %55 {offsets = [0, 32], sizes = [8, 16], strides = [1, 1]} : vector<8x48xf32> to vector<8x16xf32>
    %68 = arith.mulf %64, %67 : vector<8x16xf32>
    %69 = arith.addf %66, %68 : vector<8x16xf32>
    %70 = math.tanh %69 : vector<8x16xf32>
    %cst_20 = arith.constant 1.000000e+00 : f32
    %71 = vector.broadcast %cst_20 : f32 to vector<8x16xf32>
    %72 = arith.subf %71, %65 : vector<8x16xf32>
    %73 = arith.mulf %72, %70 : vector<8x16xf32>
    %74 = arith.mulf %65, %37 : vector<8x16xf32>
    %75 = arith.addf %73, %74 : vector<8x16xf32>
    %76 = arith.index_cast %c1_i32 : i32 to index
    %77 = memref.load %arg6[%76] : memref<16xf32, #tpu.memory_space<smem>>
    %78 = vector.broadcast %77 : f32 to vector<8x16xf32>
    %79 = arith.mulf %78, %75 : vector<8x16xf32>
    %80 = arith.addf %42, %79 : vector<8x16xf32>
    %81 = arith.index_cast %c1_i32 : i32 to index
    %82 = memref.load %arg7[%81] : memref<16xf32, #tpu.memory_space<smem>>
    %83 = vector.broadcast %82 : f32 to vector<8x16xf32>
    %84 = arith.mulf %83, %75 : vector<8x16xf32>
    %85 = arith.addf %47, %84 : vector<8x16xf32>
    %c2_i32 = arith.constant 2 : i32
    %c8_i32_21 = arith.constant 8 : i32
    %86 = arith.muli %c2_i32, %c8_i32_21 : i32
    %87 = tpu.assume_multiple %86, 8 : i32
    %88 = arith.index_cast %87 : i32 to index
    %c0_22 = arith.constant 0 : index
    %89 = vector.load %arg9[%88, %c0_22] : memref<128x48xf32, #tpu.memory_space<vmem>>, vector<8x48xf32>
    %90 = arith.truncf %75 : vector<8x16xf32> to vector<8x16xbf16>
    %cst_23 = arith.constant dense<0.000000e+00> : vector<8x48xf32>
    %91 = tpu.matmul %90, %7, %cst_23 {dimension_numbers = #tpu.dot_dimension_numbers<[1], [0], [0], [1], [0, 0, 1, 1], [], []>} : vector<8x16xbf16>, vector<16x48xbf16>, vector<8x48xf32> -> vector<8x48xf32>
    %92 = vector.broadcast %8 : vector<1x48xf32> to vector<8x48xf32>
    %93 = arith.addf %91, %92 : vector<8x48xf32>
    %94 = vector.extract_strided_slice %89 {offsets = [0, 0], sizes = [8, 32], strides = [1, 1]} : vector<8x48xf32> to vector<8x32xf32>
    %95 = vector.extract_strided_slice %93 {offsets = [0, 0], sizes = [8, 32], strides = [1, 1]} : vector<8x48xf32> to vector<8x32xf32>
    %96 = arith.addf %94, %95 : vector<8x32xf32>
    %97 = arith.negf %96 : vector<8x32xf32>
    %98 = math.exp %97 : vector<8x32xf32>
    %cst_24 = arith.constant 1.000000e+00 : f32
    %99 = vector.broadcast %cst_24 : f32 to vector<8x32xf32>
    %100 = arith.addf %99, %98 : vector<8x32xf32>
    %101 = arith.divf %99, %100 : vector<8x32xf32>
    %102 = vector.extract_strided_slice %101 {offsets = [0, 0], sizes = [8, 16], strides = [1, 1]} : vector<8x32xf32> to vector<8x16xf32>
    %103 = vector.extract_strided_slice %101 {offsets = [0, 16], sizes = [8, 16], strides = [1, 1]} : vector<8x32xf32> to vector<8x16xf32>
    %104 = vector.extract_strided_slice %89 {offsets = [0, 32], sizes = [8, 16], strides = [1, 1]} : vector<8x48xf32> to vector<8x16xf32>
    %105 = vector.extract_strided_slice %93 {offsets = [0, 32], sizes = [8, 16], strides = [1, 1]} : vector<8x48xf32> to vector<8x16xf32>
    %106 = arith.mulf %102, %105 : vector<8x16xf32>
    %107 = arith.addf %104, %106 : vector<8x16xf32>
    %108 = math.tanh %107 : vector<8x16xf32>
    %cst_25 = arith.constant 1.000000e+00 : f32
    %109 = vector.broadcast %cst_25 : f32 to vector<8x16xf32>
    %110 = arith.subf %109, %103 : vector<8x16xf32>
    %111 = arith.mulf %110, %108 : vector<8x16xf32>
    %112 = arith.mulf %103, %75 : vector<8x16xf32>
    %113 = arith.addf %111, %112 : vector<8x16xf32>
    %114 = arith.index_cast %c2_i32 : i32 to index
    %115 = memref.load %arg6[%114] : memref<16xf32, #tpu.memory_space<smem>>
    %116 = vector.broadcast %115 : f32 to vector<8x16xf32>
    %117 = arith.mulf %116, %113 : vector<8x16xf32>
    %118 = arith.addf %80, %117 : vector<8x16xf32>
    %119 = arith.index_cast %c2_i32 : i32 to index
    %120 = memref.load %arg7[%119] : memref<16xf32, #tpu.memory_space<smem>>
    %121 = vector.broadcast %120 : f32 to vector<8x16xf32>
    %122 = arith.mulf %121, %113 : vector<8x16xf32>
    %123 = arith.addf %85, %122 : vector<8x16xf32>
    %c3_i32 = arith.constant 3 : i32
    %c8_i32_26 = arith.constant 8 : i32
    %124 = arith.muli %c3_i32, %c8_i32_26 : i32
    %125 = tpu.assume_multiple %124, 8 : i32
    %126 = arith.index_cast %125 : i32 to index
    %c0_27 = arith.constant 0 : index
    %127 = vector.load %arg9[%126, %c0_27] : memref<128x48xf32, #tpu.memory_space<vmem>>, vector<8x48xf32>
    %128 = arith.truncf %113 : vector<8x16xf32> to vector<8x16xbf16>
    %cst_28 = arith.constant dense<0.000000e+00> : vector<8x48xf32>
    %129 = tpu.matmul %128, %7, %cst_28 {dimension_numbers = #tpu.dot_dimension_numbers<[1], [0], [0], [1], [0, 0, 1, 1], [], []>} : vector<8x16xbf16>, vector<16x48xbf16>, vector<8x48xf32> -> vector<8x48xf32>
    %130 = vector.broadcast %8 : vector<1x48xf32> to vector<8x48xf32>
    %131 = arith.addf %129, %130 : vector<8x48xf32>
    %132 = vector.extract_strided_slice %127 {offsets = [0, 0], sizes = [8, 32], strides = [1, 1]} : vector<8x48xf32> to vector<8x32xf32>
    %133 = vector.extract_strided_slice %131 {offsets = [0, 0], sizes = [8, 32], strides = [1, 1]} : vector<8x48xf32> to vector<8x32xf32>
    %134 = arith.addf %132, %133 : vector<8x32xf32>
    %135 = arith.negf %134 : vector<8x32xf32>
    %136 = math.exp %135 : vector<8x32xf32>
    %cst_29 = arith.constant 1.000000e+00 : f32
    %137 = vector.broadcast %cst_29 : f32 to vector<8x32xf32>
    %138 = arith.addf %137, %136 : vector<8x32xf32>
    %139 = arith.divf %137, %138 : vector<8x32xf32>
    %140 = vector.extract_strided_slice %139 {offsets = [0, 0], sizes = [8, 16], strides = [1, 1]} : vector<8x32xf32> to vector<8x16xf32>
    %141 = vector.extract_strided_slice %139 {offsets = [0, 16], sizes = [8, 16], strides = [1, 1]} : vector<8x32xf32> to vector<8x16xf32>
    %142 = vector.extract_strided_slice %127 {offsets = [0, 32], sizes = [8, 16], strides = [1, 1]} : vector<8x48xf32> to vector<8x16xf32>
    %143 = vector.extract_strided_slice %131 {offsets = [0, 32], sizes = [8, 16], strides = [1, 1]} : vector<8x48xf32> to vector<8x16xf32>
    %144 = arith.mulf %140, %143 : vector<8x16xf32>
    %145 = arith.addf %142, %144 : vector<8x16xf32>
    %146 = math.tanh %145 : vector<8x16xf32>
    %cst_30 = arith.constant 1.000000e+00 : f32
    %147 = vector.broadcast %cst_30 : f32 to vector<8x16xf32>
    %148 = arith.subf %147, %141 : vector<8x16xf32>
    %149 = arith.mulf %148, %146 : vector<8x16xf32>
    %150 = arith.mulf %141, %113 : vector<8x16xf32>
    %151 = arith.addf %149, %150 : vector<8x16xf32>
    %152 = arith.index_cast %c3_i32 : i32 to index
    %153 = memref.load %arg6[%152] : memref<16xf32, #tpu.memory_space<smem>>
    %154 = vector.broadcast %153 : f32 to vector<8x16xf32>
    %155 = arith.mulf %154, %151 : vector<8x16xf32>
    %156 = arith.addf %118, %155 : vector<8x16xf32>
    %157 = arith.index_cast %c3_i32 : i32 to index
    %158 = memref.load %arg7[%157] : memref<16xf32, #tpu.memory_space<smem>>
    %159 = vector.broadcast %158 : f32 to vector<8x16xf32>
    %160 = arith.mulf %159, %151 : vector<8x16xf32>
    %161 = arith.addf %123, %160 : vector<8x16xf32>
    %c4_i32 = arith.constant 4 : i32
    %c8_i32_31 = arith.constant 8 : i32
    %162 = arith.muli %c4_i32, %c8_i32_31 : i32
    %163 = tpu.assume_multiple %162, 8 : i32
    %164 = arith.index_cast %163 : i32 to index
    %c0_32 = arith.constant 0 : index
    %165 = vector.load %arg9[%164, %c0_32] : memref<128x48xf32, #tpu.memory_space<vmem>>, vector<8x48xf32>
    %166 = arith.truncf %151 : vector<8x16xf32> to vector<8x16xbf16>
    %cst_33 = arith.constant dense<0.000000e+00> : vector<8x48xf32>
    %167 = tpu.matmul %166, %7, %cst_33 {dimension_numbers = #tpu.dot_dimension_numbers<[1], [0], [0], [1], [0, 0, 1, 1], [], []>} : vector<8x16xbf16>, vector<16x48xbf16>, vector<8x48xf32> -> vector<8x48xf32>
    %168 = vector.broadcast %8 : vector<1x48xf32> to vector<8x48xf32>
    %169 = arith.addf %167, %168 : vector<8x48xf32>
    %170 = vector.extract_strided_slice %165 {offsets = [0, 0], sizes = [8, 32], strides = [1, 1]} : vector<8x48xf32> to vector<8x32xf32>
    %171 = vector.extract_strided_slice %169 {offsets = [0, 0], sizes = [8, 32], strides = [1, 1]} : vector<8x48xf32> to vector<8x32xf32>
    %172 = arith.addf %170, %171 : vector<8x32xf32>
    %173 = arith.negf %172 : vector<8x32xf32>
    %174 = math.exp %173 : vector<8x32xf32>
    %cst_34 = arith.constant 1.000000e+00 : f32
    %175 = vector.broadcast %cst_34 : f32 to vector<8x32xf32>
    %176 = arith.addf %175, %174 : vector<8x32xf32>
    %177 = arith.divf %175, %176 : vector<8x32xf32>
    %178 = vector.extract_strided_slice %177 {offsets = [0, 0], sizes = [8, 16], strides = [1, 1]} : vector<8x32xf32> to vector<8x16xf32>
    %179 = vector.extract_strided_slice %177 {offsets = [0, 16], sizes = [8, 16], strides = [1, 1]} : vector<8x32xf32> to vector<8x16xf32>
    %180 = vector.extract_strided_slice %165 {offsets = [0, 32], sizes = [8, 16], strides = [1, 1]} : vector<8x48xf32> to vector<8x16xf32>
    %181 = vector.extract_strided_slice %169 {offsets = [0, 32], sizes = [8, 16], strides = [1, 1]} : vector<8x48xf32> to vector<8x16xf32>
    %182 = arith.mulf %178, %181 : vector<8x16xf32>
    %183 = arith.addf %180, %182 : vector<8x16xf32>
    %184 = math.tanh %183 : vector<8x16xf32>
    %cst_35 = arith.constant 1.000000e+00 : f32
    %185 = vector.broadcast %cst_35 : f32 to vector<8x16xf32>
    %186 = arith.subf %185, %179 : vector<8x16xf32>
    %187 = arith.mulf %186, %184 : vector<8x16xf32>
    %188 = arith.mulf %179, %151 : vector<8x16xf32>
    %189 = arith.addf %187, %188 : vector<8x16xf32>
    %190 = arith.index_cast %c4_i32 : i32 to index
    %191 = memref.load %arg6[%190] : memref<16xf32, #tpu.memory_space<smem>>
    %192 = vector.broadcast %191 : f32 to vector<8x16xf32>
    %193 = arith.mulf %192, %189 : vector<8x16xf32>
    %194 = arith.addf %156, %193 : vector<8x16xf32>
    %195 = arith.index_cast %c4_i32 : i32 to index
    %196 = memref.load %arg7[%195] : memref<16xf32, #tpu.memory_space<smem>>
    %197 = vector.broadcast %196 : f32 to vector<8x16xf32>
    %198 = arith.mulf %197, %189 : vector<8x16xf32>
    %199 = arith.addf %161, %198 : vector<8x16xf32>
    %c5_i32 = arith.constant 5 : i32
    %c8_i32_36 = arith.constant 8 : i32
    %200 = arith.muli %c5_i32, %c8_i32_36 : i32
    %201 = tpu.assume_multiple %200, 8 : i32
    %202 = arith.index_cast %201 : i32 to index
    %c0_37 = arith.constant 0 : index
    %203 = vector.load %arg9[%202, %c0_37] : memref<128x48xf32, #tpu.memory_space<vmem>>, vector<8x48xf32>
    %204 = arith.truncf %189 : vector<8x16xf32> to vector<8x16xbf16>
    %cst_38 = arith.constant dense<0.000000e+00> : vector<8x48xf32>
    %205 = tpu.matmul %204, %7, %cst_38 {dimension_numbers = #tpu.dot_dimension_numbers<[1], [0], [0], [1], [0, 0, 1, 1], [], []>} : vector<8x16xbf16>, vector<16x48xbf16>, vector<8x48xf32> -> vector<8x48xf32>
    %206 = vector.broadcast %8 : vector<1x48xf32> to vector<8x48xf32>
    %207 = arith.addf %205, %206 : vector<8x48xf32>
    %208 = vector.extract_strided_slice %203 {offsets = [0, 0], sizes = [8, 32], strides = [1, 1]} : vector<8x48xf32> to vector<8x32xf32>
    %209 = vector.extract_strided_slice %207 {offsets = [0, 0], sizes = [8, 32], strides = [1, 1]} : vector<8x48xf32> to vector<8x32xf32>
    %210 = arith.addf %208, %209 : vector<8x32xf32>
    %211 = arith.negf %210 : vector<8x32xf32>
    %212 = math.exp %211 : vector<8x32xf32>
    %cst_39 = arith.constant 1.000000e+00 : f32
    %213 = vector.broadcast %cst_39 : f32 to vector<8x32xf32>
    %214 = arith.addf %213, %212 : vector<8x32xf32>
    %215 = arith.divf %213, %214 : vector<8x32xf32>
    %216 = vector.extract_strided_slice %215 {offsets = [0, 0], sizes = [8, 16], strides = [1, 1]} : vector<8x32xf32> to vector<8x16xf32>
    %217 = vector.extract_strided_slice %215 {offsets = [0, 16], sizes = [8, 16], strides = [1, 1]} : vector<8x32xf32> to vector<8x16xf32>
    %218 = vector.extract_strided_slice %203 {offsets = [0, 32], sizes = [8, 16], strides = [1, 1]} : vector<8x48xf32> to vector<8x16xf32>
    %219 = vector.extract_strided_slice %207 {offsets = [0, 32], sizes = [8, 16], strides = [1, 1]} : vector<8x48xf32> to vector<8x16xf32>
    %220 = arith.mulf %216, %219 : vector<8x16xf32>
    %221 = arith.addf %218, %220 : vector<8x16xf32>
    %222 = math.tanh %221 : vector<8x16xf32>
    %cst_40 = arith.constant 1.000000e+00 : f32
    %223 = vector.broadcast %cst_40 : f32 to vector<8x16xf32>
    %224 = arith.subf %223, %217 : vector<8x16xf32>
    %225 = arith.mulf %224, %222 : vector<8x16xf32>
    %226 = arith.mulf %217, %189 : vector<8x16xf32>
    %227 = arith.addf %225, %226 : vector<8x16xf32>
    %228 = arith.index_cast %c5_i32 : i32 to index
    %229 = memref.load %arg6[%228] : memref<16xf32, #tpu.memory_space<smem>>
    %230 = vector.broadcast %229 : f32 to vector<8x16xf32>
    %231 = arith.mulf %230, %227 : vector<8x16xf32>
    %232 = arith.addf %194, %231 : vector<8x16xf32>
    %233 = arith.index_cast %c5_i32 : i32 to index
    %234 = memref.load %arg7[%233] : memref<16xf32, #tpu.memory_space<smem>>
    %235 = vector.broadcast %234 : f32 to vector<8x16xf32>
    %236 = arith.mulf %235, %227 : vector<8x16xf32>
    %237 = arith.addf %199, %236 : vector<8x16xf32>
    %c6_i32 = arith.constant 6 : i32
    %c8_i32_41 = arith.constant 8 : i32
    %238 = arith.muli %c6_i32, %c8_i32_41 : i32
    %239 = tpu.assume_multiple %238, 8 : i32
    %240 = arith.index_cast %239 : i32 to index
    %c0_42 = arith.constant 0 : index
    %241 = vector.load %arg9[%240, %c0_42] : memref<128x48xf32, #tpu.memory_space<vmem>>, vector<8x48xf32>
    %242 = arith.truncf %227 : vector<8x16xf32> to vector<8x16xbf16>
    %cst_43 = arith.constant dense<0.000000e+00> : vector<8x48xf32>
    %243 = tpu.matmul %242, %7, %cst_43 {dimension_numbers = #tpu.dot_dimension_numbers<[1], [0], [0], [1], [0, 0, 1, 1], [], []>} : vector<8x16xbf16>, vector<16x48xbf16>, vector<8x48xf32> -> vector<8x48xf32>
    %244 = vector.broadcast %8 : vector<1x48xf32> to vector<8x48xf32>
    %245 = arith.addf %243, %244 : vector<8x48xf32>
    %246 = vector.extract_strided_slice %241 {offsets = [0, 0], sizes = [8, 32], strides = [1, 1]} : vector<8x48xf32> to vector<8x32xf32>
    %247 = vector.extract_strided_slice %245 {offsets = [0, 0], sizes = [8, 32], strides = [1, 1]} : vector<8x48xf32> to vector<8x32xf32>
    %248 = arith.addf %246, %247 : vector<8x32xf32>
    %249 = arith.negf %248 : vector<8x32xf32>
    %250 = math.exp %249 : vector<8x32xf32>
    %cst_44 = arith.constant 1.000000e+00 : f32
    %251 = vector.broadcast %cst_44 : f32 to vector<8x32xf32>
    %252 = arith.addf %251, %250 : vector<8x32xf32>
    %253 = arith.divf %251, %252 : vector<8x32xf32>
    %254 = vector.extract_strided_slice %253 {offsets = [0, 0], sizes = [8, 16], strides = [1, 1]} : vector<8x32xf32> to vector<8x16xf32>
    %255 = vector.extract_strided_slice %253 {offsets = [0, 16], sizes = [8, 16], strides = [1, 1]} : vector<8x32xf32> to vector<8x16xf32>
    %256 = vector.extract_strided_slice %241 {offsets = [0, 32], sizes = [8, 16], strides = [1, 1]} : vector<8x48xf32> to vector<8x16xf32>
    %257 = vector.extract_strided_slice %245 {offsets = [0, 32], sizes = [8, 16], strides = [1, 1]} : vector<8x48xf32> to vector<8x16xf32>
    %258 = arith.mulf %254, %257 : vector<8x16xf32>
    %259 = arith.addf %256, %258 : vector<8x16xf32>
    %260 = math.tanh %259 : vector<8x16xf32>
    %cst_45 = arith.constant 1.000000e+00 : f32
    %261 = vector.broadcast %cst_45 : f32 to vector<8x16xf32>
    %262 = arith.subf %261, %255 : vector<8x16xf32>
    %263 = arith.mulf %262, %260 : vector<8x16xf32>
    %264 = arith.mulf %255, %227 : vector<8x16xf32>
    %265 = arith.addf %263, %264 : vector<8x16xf32>
    %266 = arith.index_cast %c6_i32 : i32 to index
    %267 = memref.load %arg6[%266] : memref<16xf32, #tpu.memory_space<smem>>
    %268 = vector.broadcast %267 : f32 to vector<8x16xf32>
    %269 = arith.mulf %268, %265 : vector<8x16xf32>
    %270 = arith.addf %232, %269 : vector<8x16xf32>
    %271 = arith.index_cast %c6_i32 : i32 to index
    %272 = memref.load %arg7[%271] : memref<16xf32, #tpu.memory_space<smem>>
    %273 = vector.broadcast %272 : f32 to vector<8x16xf32>
    %274 = arith.mulf %273, %265 : vector<8x16xf32>
    %275 = arith.addf %237, %274 : vector<8x16xf32>
    %c7_i32 = arith.constant 7 : i32
    %c8_i32_46 = arith.constant 8 : i32
    %276 = arith.muli %c7_i32, %c8_i32_46 : i32
    %277 = tpu.assume_multiple %276, 8 : i32
    %278 = arith.index_cast %277 : i32 to index
    %c0_47 = arith.constant 0 : index
    %279 = vector.load %arg9[%278, %c0_47] : memref<128x48xf32, #tpu.memory_space<vmem>>, vector<8x48xf32>
    %280 = arith.truncf %265 : vector<8x16xf32> to vector<8x16xbf16>
    %cst_48 = arith.constant dense<0.000000e+00> : vector<8x48xf32>
    %281 = tpu.matmul %280, %7, %cst_48 {dimension_numbers = #tpu.dot_dimension_numbers<[1], [0], [0], [1], [0, 0, 1, 1], [], []>} : vector<8x16xbf16>, vector<16x48xbf16>, vector<8x48xf32> -> vector<8x48xf32>
    %282 = vector.broadcast %8 : vector<1x48xf32> to vector<8x48xf32>
    %283 = arith.addf %281, %282 : vector<8x48xf32>
    %284 = vector.extract_strided_slice %279 {offsets = [0, 0], sizes = [8, 32], strides = [1, 1]} : vector<8x48xf32> to vector<8x32xf32>
    %285 = vector.extract_strided_slice %283 {offsets = [0, 0], sizes = [8, 32], strides = [1, 1]} : vector<8x48xf32> to vector<8x32xf32>
    %286 = arith.addf %284, %285 : vector<8x32xf32>
    %287 = arith.negf %286 : vector<8x32xf32>
    %288 = math.exp %287 : vector<8x32xf32>
    %cst_49 = arith.constant 1.000000e+00 : f32
    %289 = vector.broadcast %cst_49 : f32 to vector<8x32xf32>
    %290 = arith.addf %289, %288 : vector<8x32xf32>
    %291 = arith.divf %289, %290 : vector<8x32xf32>
    %292 = vector.extract_strided_slice %291 {offsets = [0, 0], sizes = [8, 16], strides = [1, 1]} : vector<8x32xf32> to vector<8x16xf32>
    %293 = vector.extract_strided_slice %291 {offsets = [0, 16], sizes = [8, 16], strides = [1, 1]} : vector<8x32xf32> to vector<8x16xf32>
    %294 = vector.extract_strided_slice %279 {offsets = [0, 32], sizes = [8, 16], strides = [1, 1]} : vector<8x48xf32> to vector<8x16xf32>
    %295 = vector.extract_strided_slice %283 {offsets = [0, 32], sizes = [8, 16], strides = [1, 1]} : vector<8x48xf32> to vector<8x16xf32>
    %296 = arith.mulf %292, %295 : vector<8x16xf32>
    %297 = arith.addf %294, %296 : vector<8x16xf32>
    %298 = math.tanh %297 : vector<8x16xf32>
    %cst_50 = arith.constant 1.000000e+00 : f32
    %299 = vector.broadcast %cst_50 : f32 to vector<8x16xf32>
    %300 = arith.subf %299, %293 : vector<8x16xf32>
    %301 = arith.mulf %300, %298 : vector<8x16xf32>
    %302 = arith.mulf %293, %265 : vector<8x16xf32>
    %303 = arith.addf %301, %302 : vector<8x16xf32>
    %304 = arith.index_cast %c7_i32 : i32 to index
    %305 = memref.load %arg6[%304] : memref<16xf32, #tpu.memory_space<smem>>
    %306 = vector.broadcast %305 : f32 to vector<8x16xf32>
    %307 = arith.mulf %306, %303 : vector<8x16xf32>
    %308 = arith.addf %270, %307 : vector<8x16xf32>
    %309 = arith.index_cast %c7_i32 : i32 to index
    %310 = memref.load %arg7[%309] : memref<16xf32, #tpu.memory_space<smem>>
    %311 = vector.broadcast %310 : f32 to vector<8x16xf32>
    %312 = arith.mulf %311, %303 : vector<8x16xf32>
    %313 = arith.addf %275, %312 : vector<8x16xf32>
    %c8_i32_51 = arith.constant 8 : i32
    %c8_i32_52 = arith.constant 8 : i32
    %314 = arith.muli %c8_i32_51, %c8_i32_52 : i32
    %315 = tpu.assume_multiple %314, 8 : i32
    %316 = arith.index_cast %315 : i32 to index
    %c0_53 = arith.constant 0 : index
    %317 = vector.load %arg9[%316, %c0_53] : memref<128x48xf32, #tpu.memory_space<vmem>>, vector<8x48xf32>
    %318 = arith.truncf %303 : vector<8x16xf32> to vector<8x16xbf16>
    %cst_54 = arith.constant dense<0.000000e+00> : vector<8x48xf32>
    %319 = tpu.matmul %318, %7, %cst_54 {dimension_numbers = #tpu.dot_dimension_numbers<[1], [0], [0], [1], [0, 0, 1, 1], [], []>} : vector<8x16xbf16>, vector<16x48xbf16>, vector<8x48xf32> -> vector<8x48xf32>
    %320 = vector.broadcast %8 : vector<1x48xf32> to vector<8x48xf32>
    %321 = arith.addf %319, %320 : vector<8x48xf32>
    %322 = vector.extract_strided_slice %317 {offsets = [0, 0], sizes = [8, 32], strides = [1, 1]} : vector<8x48xf32> to vector<8x32xf32>
    %323 = vector.extract_strided_slice %321 {offsets = [0, 0], sizes = [8, 32], strides = [1, 1]} : vector<8x48xf32> to vector<8x32xf32>
    %324 = arith.addf %322, %323 : vector<8x32xf32>
    %325 = arith.negf %324 : vector<8x32xf32>
    %326 = math.exp %325 : vector<8x32xf32>
    %cst_55 = arith.constant 1.000000e+00 : f32
    %327 = vector.broadcast %cst_55 : f32 to vector<8x32xf32>
    %328 = arith.addf %327, %326 : vector<8x32xf32>
    %329 = arith.divf %327, %328 : vector<8x32xf32>
    %330 = vector.extract_strided_slice %329 {offsets = [0, 0], sizes = [8, 16], strides = [1, 1]} : vector<8x32xf32> to vector<8x16xf32>
    %331 = vector.extract_strided_slice %329 {offsets = [0, 16], sizes = [8, 16], strides = [1, 1]} : vector<8x32xf32> to vector<8x16xf32>
    %332 = vector.extract_strided_slice %317 {offsets = [0, 32], sizes = [8, 16], strides = [1, 1]} : vector<8x48xf32> to vector<8x16xf32>
    %333 = vector.extract_strided_slice %321 {offsets = [0, 32], sizes = [8, 16], strides = [1, 1]} : vector<8x48xf32> to vector<8x16xf32>
    %334 = arith.mulf %330, %333 : vector<8x16xf32>
    %335 = arith.addf %332, %334 : vector<8x16xf32>
    %336 = math.tanh %335 : vector<8x16xf32>
    %cst_56 = arith.constant 1.000000e+00 : f32
    %337 = vector.broadcast %cst_56 : f32 to vector<8x16xf32>
    %338 = arith.subf %337, %331 : vector<8x16xf32>
    %339 = arith.mulf %338, %336 : vector<8x16xf32>
    %340 = arith.mulf %331, %303 : vector<8x16xf32>
    %341 = arith.addf %339, %340 : vector<8x16xf32>
    %342 = arith.index_cast %c8_i32_51 : i32 to index
    %343 = memref.load %arg6[%342] : memref<16xf32, #tpu.memory_space<smem>>
    %344 = vector.broadcast %343 : f32 to vector<8x16xf32>
    %345 = arith.mulf %344, %341 : vector<8x16xf32>
    %346 = arith.addf %308, %345 : vector<8x16xf32>
    %347 = arith.index_cast %c8_i32_51 : i32 to index
    %348 = memref.load %arg7[%347] : memref<16xf32, #tpu.memory_space<smem>>
    %349 = vector.broadcast %348 : f32 to vector<8x16xf32>
    %350 = arith.mulf %349, %341 : vector<8x16xf32>
    %351 = arith.addf %313, %350 : vector<8x16xf32>
    %c9_i32 = arith.constant 9 : i32
    %c8_i32_57 = arith.constant 8 : i32
    %352 = arith.muli %c9_i32, %c8_i32_57 : i32
    %353 = tpu.assume_multiple %352, 8 : i32
    %354 = arith.index_cast %353 : i32 to index
    %c0_58 = arith.constant 0 : index
    %355 = vector.load %arg9[%354, %c0_58] : memref<128x48xf32, #tpu.memory_space<vmem>>, vector<8x48xf32>
    %356 = arith.truncf %341 : vector<8x16xf32> to vector<8x16xbf16>
    %cst_59 = arith.constant dense<0.000000e+00> : vector<8x48xf32>
    %357 = tpu.matmul %356, %7, %cst_59 {dimension_numbers = #tpu.dot_dimension_numbers<[1], [0], [0], [1], [0, 0, 1, 1], [], []>} : vector<8x16xbf16>, vector<16x48xbf16>, vector<8x48xf32> -> vector<8x48xf32>
    %358 = vector.broadcast %8 : vector<1x48xf32> to vector<8x48xf32>
    %359 = arith.addf %357, %358 : vector<8x48xf32>
    %360 = vector.extract_strided_slice %355 {offsets = [0, 0], sizes = [8, 32], strides = [1, 1]} : vector<8x48xf32> to vector<8x32xf32>
    %361 = vector.extract_strided_slice %359 {offsets = [0, 0], sizes = [8, 32], strides = [1, 1]} : vector<8x48xf32> to vector<8x32xf32>
    %362 = arith.addf %360, %361 : vector<8x32xf32>
    %363 = arith.negf %362 : vector<8x32xf32>
    %364 = math.exp %363 : vector<8x32xf32>
    %cst_60 = arith.constant 1.000000e+00 : f32
    %365 = vector.broadcast %cst_60 : f32 to vector<8x32xf32>
    %366 = arith.addf %365, %364 : vector<8x32xf32>
    %367 = arith.divf %365, %366 : vector<8x32xf32>
    %368 = vector.extract_strided_slice %367 {offsets = [0, 0], sizes = [8, 16], strides = [1, 1]} : vector<8x32xf32> to vector<8x16xf32>
    %369 = vector.extract_strided_slice %367 {offsets = [0, 16], sizes = [8, 16], strides = [1, 1]} : vector<8x32xf32> to vector<8x16xf32>
    %370 = vector.extract_strided_slice %355 {offsets = [0, 32], sizes = [8, 16], strides = [1, 1]} : vector<8x48xf32> to vector<8x16xf32>
    %371 = vector.extract_strided_slice %359 {offsets = [0, 32], sizes = [8, 16], strides = [1, 1]} : vector<8x48xf32> to vector<8x16xf32>
    %372 = arith.mulf %368, %371 : vector<8x16xf32>
    %373 = arith.addf %370, %372 : vector<8x16xf32>
    %374 = math.tanh %373 : vector<8x16xf32>
    %cst_61 = arith.constant 1.000000e+00 : f32
    %375 = vector.broadcast %cst_61 : f32 to vector<8x16xf32>
    %376 = arith.subf %375, %369 : vector<8x16xf32>
    %377 = arith.mulf %376, %374 : vector<8x16xf32>
    %378 = arith.mulf %369, %341 : vector<8x16xf32>
    %379 = arith.addf %377, %378 : vector<8x16xf32>
    %380 = arith.index_cast %c9_i32 : i32 to index
    %381 = memref.load %arg6[%380] : memref<16xf32, #tpu.memory_space<smem>>
    %382 = vector.broadcast %381 : f32 to vector<8x16xf32>
    %383 = arith.mulf %382, %379 : vector<8x16xf32>
    %384 = arith.addf %346, %383 : vector<8x16xf32>
    %385 = arith.index_cast %c9_i32 : i32 to index
    %386 = memref.load %arg7[%385] : memref<16xf32, #tpu.memory_space<smem>>
    %387 = vector.broadcast %386 : f32 to vector<8x16xf32>
    %388 = arith.mulf %387, %379 : vector<8x16xf32>
    %389 = arith.addf %351, %388 : vector<8x16xf32>
    %c10_i32 = arith.constant 10 : i32
    %c8_i32_62 = arith.constant 8 : i32
    %390 = arith.muli %c10_i32, %c8_i32_62 : i32
    %391 = tpu.assume_multiple %390, 8 : i32
    %392 = arith.index_cast %391 : i32 to index
    %c0_63 = arith.constant 0 : index
    %393 = vector.load %arg9[%392, %c0_63] : memref<128x48xf32, #tpu.memory_space<vmem>>, vector<8x48xf32>
    %394 = arith.truncf %379 : vector<8x16xf32> to vector<8x16xbf16>
    %cst_64 = arith.constant dense<0.000000e+00> : vector<8x48xf32>
    %395 = tpu.matmul %394, %7, %cst_64 {dimension_numbers = #tpu.dot_dimension_numbers<[1], [0], [0], [1], [0, 0, 1, 1], [], []>} : vector<8x16xbf16>, vector<16x48xbf16>, vector<8x48xf32> -> vector<8x48xf32>
    %396 = vector.broadcast %8 : vector<1x48xf32> to vector<8x48xf32>
    %397 = arith.addf %395, %396 : vector<8x48xf32>
    %398 = vector.extract_strided_slice %393 {offsets = [0, 0], sizes = [8, 32], strides = [1, 1]} : vector<8x48xf32> to vector<8x32xf32>
    %399 = vector.extract_strided_slice %397 {offsets = [0, 0], sizes = [8, 32], strides = [1, 1]} : vector<8x48xf32> to vector<8x32xf32>
    %400 = arith.addf %398, %399 : vector<8x32xf32>
    %401 = arith.negf %400 : vector<8x32xf32>
    %402 = math.exp %401 : vector<8x32xf32>
    %cst_65 = arith.constant 1.000000e+00 : f32
    %403 = vector.broadcast %cst_65 : f32 to vector<8x32xf32>
    %404 = arith.addf %403, %402 : vector<8x32xf32>
    %405 = arith.divf %403, %404 : vector<8x32xf32>
    %406 = vector.extract_strided_slice %405 {offsets = [0, 0], sizes = [8, 16], strides = [1, 1]} : vector<8x32xf32> to vector<8x16xf32>
    %407 = vector.extract_strided_slice %405 {offsets = [0, 16], sizes = [8, 16], strides = [1, 1]} : vector<8x32xf32> to vector<8x16xf32>
    %408 = vector.extract_strided_slice %393 {offsets = [0, 32], sizes = [8, 16], strides = [1, 1]} : vector<8x48xf32> to vector<8x16xf32>
    %409 = vector.extract_strided_slice %397 {offsets = [0, 32], sizes = [8, 16], strides = [1, 1]} : vector<8x48xf32> to vector<8x16xf32>
    %410 = arith.mulf %406, %409 : vector<8x16xf32>
    %411 = arith.addf %408, %410 : vector<8x16xf32>
    %412 = math.tanh %411 : vector<8x16xf32>
    %cst_66 = arith.constant 1.000000e+00 : f32
    %413 = vector.broadcast %cst_66 : f32 to vector<8x16xf32>
    %414 = arith.subf %413, %407 : vector<8x16xf32>
    %415 = arith.mulf %414, %412 : vector<8x16xf32>
    %416 = arith.mulf %407, %379 : vector<8x16xf32>
    %417 = arith.addf %415, %416 : vector<8x16xf32>
    %418 = arith.index_cast %c10_i32 : i32 to index
    %419 = memref.load %arg6[%418] : memref<16xf32, #tpu.memory_space<smem>>
    %420 = vector.broadcast %419 : f32 to vector<8x16xf32>
    %421 = arith.mulf %420, %417 : vector<8x16xf32>
    %422 = arith.addf %384, %421 : vector<8x16xf32>
    %423 = arith.index_cast %c10_i32 : i32 to index
    %424 = memref.load %arg7[%423] : memref<16xf32, #tpu.memory_space<smem>>
    %425 = vector.broadcast %424 : f32 to vector<8x16xf32>
    %426 = arith.mulf %425, %417 : vector<8x16xf32>
    %427 = arith.addf %389, %426 : vector<8x16xf32>
    %c11_i32 = arith.constant 11 : i32
    %c8_i32_67 = arith.constant 8 : i32
    %428 = arith.muli %c11_i32, %c8_i32_67 : i32
    %429 = tpu.assume_multiple %428, 8 : i32
    %430 = arith.index_cast %429 : i32 to index
    %c0_68 = arith.constant 0 : index
    %431 = vector.load %arg9[%430, %c0_68] : memref<128x48xf32, #tpu.memory_space<vmem>>, vector<8x48xf32>
    %432 = arith.truncf %417 : vector<8x16xf32> to vector<8x16xbf16>
    %cst_69 = arith.constant dense<0.000000e+00> : vector<8x48xf32>
    %433 = tpu.matmul %432, %7, %cst_69 {dimension_numbers = #tpu.dot_dimension_numbers<[1], [0], [0], [1], [0, 0, 1, 1], [], []>} : vector<8x16xbf16>, vector<16x48xbf16>, vector<8x48xf32> -> vector<8x48xf32>
    %434 = vector.broadcast %8 : vector<1x48xf32> to vector<8x48xf32>
    %435 = arith.addf %433, %434 : vector<8x48xf32>
    %436 = vector.extract_strided_slice %431 {offsets = [0, 0], sizes = [8, 32], strides = [1, 1]} : vector<8x48xf32> to vector<8x32xf32>
    %437 = vector.extract_strided_slice %435 {offsets = [0, 0], sizes = [8, 32], strides = [1, 1]} : vector<8x48xf32> to vector<8x32xf32>
    %438 = arith.addf %436, %437 : vector<8x32xf32>
    %439 = arith.negf %438 : vector<8x32xf32>
    %440 = math.exp %439 : vector<8x32xf32>
    %cst_70 = arith.constant 1.000000e+00 : f32
    %441 = vector.broadcast %cst_70 : f32 to vector<8x32xf32>
    %442 = arith.addf %441, %440 : vector<8x32xf32>
    %443 = arith.divf %441, %442 : vector<8x32xf32>
    %444 = vector.extract_strided_slice %443 {offsets = [0, 0], sizes = [8, 16], strides = [1, 1]} : vector<8x32xf32> to vector<8x16xf32>
    %445 = vector.extract_strided_slice %443 {offsets = [0, 16], sizes = [8, 16], strides = [1, 1]} : vector<8x32xf32> to vector<8x16xf32>
    %446 = vector.extract_strided_slice %431 {offsets = [0, 32], sizes = [8, 16], strides = [1, 1]} : vector<8x48xf32> to vector<8x16xf32>
    %447 = vector.extract_strided_slice %435 {offsets = [0, 32], sizes = [8, 16], strides = [1, 1]} : vector<8x48xf32> to vector<8x16xf32>
    %448 = arith.mulf %444, %447 : vector<8x16xf32>
    %449 = arith.addf %446, %448 : vector<8x16xf32>
    %450 = math.tanh %449 : vector<8x16xf32>
    %cst_71 = arith.constant 1.000000e+00 : f32
    %451 = vector.broadcast %cst_71 : f32 to vector<8x16xf32>
    %452 = arith.subf %451, %445 : vector<8x16xf32>
    %453 = arith.mulf %452, %450 : vector<8x16xf32>
    %454 = arith.mulf %445, %417 : vector<8x16xf32>
    %455 = arith.addf %453, %454 : vector<8x16xf32>
    %456 = arith.index_cast %c11_i32 : i32 to index
    %457 = memref.load %arg6[%456] : memref<16xf32, #tpu.memory_space<smem>>
    %458 = vector.broadcast %457 : f32 to vector<8x16xf32>
    %459 = arith.mulf %458, %455 : vector<8x16xf32>
    %460 = arith.addf %422, %459 : vector<8x16xf32>
    %461 = arith.index_cast %c11_i32 : i32 to index
    %462 = memref.load %arg7[%461] : memref<16xf32, #tpu.memory_space<smem>>
    %463 = vector.broadcast %462 : f32 to vector<8x16xf32>
    %464 = arith.mulf %463, %455 : vector<8x16xf32>
    %465 = arith.addf %427, %464 : vector<8x16xf32>
    %c12_i32 = arith.constant 12 : i32
    %c8_i32_72 = arith.constant 8 : i32
    %466 = arith.muli %c12_i32, %c8_i32_72 : i32
    %467 = tpu.assume_multiple %466, 8 : i32
    %468 = arith.index_cast %467 : i32 to index
    %c0_73 = arith.constant 0 : index
    %469 = vector.load %arg9[%468, %c0_73] : memref<128x48xf32, #tpu.memory_space<vmem>>, vector<8x48xf32>
    %470 = arith.truncf %455 : vector<8x16xf32> to vector<8x16xbf16>
    %cst_74 = arith.constant dense<0.000000e+00> : vector<8x48xf32>
    %471 = tpu.matmul %470, %7, %cst_74 {dimension_numbers = #tpu.dot_dimension_numbers<[1], [0], [0], [1], [0, 0, 1, 1], [], []>} : vector<8x16xbf16>, vector<16x48xbf16>, vector<8x48xf32> -> vector<8x48xf32>
    %472 = vector.broadcast %8 : vector<1x48xf32> to vector<8x48xf32>
    %473 = arith.addf %471, %472 : vector<8x48xf32>
    %474 = vector.extract_strided_slice %469 {offsets = [0, 0], sizes = [8, 32], strides = [1, 1]} : vector<8x48xf32> to vector<8x32xf32>
    %475 = vector.extract_strided_slice %473 {offsets = [0, 0], sizes = [8, 32], strides = [1, 1]} : vector<8x48xf32> to vector<8x32xf32>
    %476 = arith.addf %474, %475 : vector<8x32xf32>
    %477 = arith.negf %476 : vector<8x32xf32>
    %478 = math.exp %477 : vector<8x32xf32>
    %cst_75 = arith.constant 1.000000e+00 : f32
    %479 = vector.broadcast %cst_75 : f32 to vector<8x32xf32>
    %480 = arith.addf %479, %478 : vector<8x32xf32>
    %481 = arith.divf %479, %480 : vector<8x32xf32>
    %482 = vector.extract_strided_slice %481 {offsets = [0, 0], sizes = [8, 16], strides = [1, 1]} : vector<8x32xf32> to vector<8x16xf32>
    %483 = vector.extract_strided_slice %481 {offsets = [0, 16], sizes = [8, 16], strides = [1, 1]} : vector<8x32xf32> to vector<8x16xf32>
    %484 = vector.extract_strided_slice %469 {offsets = [0, 32], sizes = [8, 16], strides = [1, 1]} : vector<8x48xf32> to vector<8x16xf32>
    %485 = vector.extract_strided_slice %473 {offsets = [0, 32], sizes = [8, 16], strides = [1, 1]} : vector<8x48xf32> to vector<8x16xf32>
    %486 = arith.mulf %482, %485 : vector<8x16xf32>
    %487 = arith.addf %484, %486 : vector<8x16xf32>
    %488 = math.tanh %487 : vector<8x16xf32>
    %cst_76 = arith.constant 1.000000e+00 : f32
    %489 = vector.broadcast %cst_76 : f32 to vector<8x16xf32>
    %490 = arith.subf %489, %483 : vector<8x16xf32>
    %491 = arith.mulf %490, %488 : vector<8x16xf32>
    %492 = arith.mulf %483, %455 : vector<8x16xf32>
    %493 = arith.addf %491, %492 : vector<8x16xf32>
    %494 = arith.index_cast %c12_i32 : i32 to index
    %495 = memref.load %arg6[%494] : memref<16xf32, #tpu.memory_space<smem>>
    %496 = vector.broadcast %495 : f32 to vector<8x16xf32>
    %497 = arith.mulf %496, %493 : vector<8x16xf32>
    %498 = arith.addf %460, %497 : vector<8x16xf32>
    %499 = arith.index_cast %c12_i32 : i32 to index
    %500 = memref.load %arg7[%499] : memref<16xf32, #tpu.memory_space<smem>>
    %501 = vector.broadcast %500 : f32 to vector<8x16xf32>
    %502 = arith.mulf %501, %493 : vector<8x16xf32>
    %503 = arith.addf %465, %502 : vector<8x16xf32>
    %c13_i32 = arith.constant 13 : i32
    %c8_i32_77 = arith.constant 8 : i32
    %504 = arith.muli %c13_i32, %c8_i32_77 : i32
    %505 = tpu.assume_multiple %504, 8 : i32
    %506 = arith.index_cast %505 : i32 to index
    %c0_78 = arith.constant 0 : index
    %507 = vector.load %arg9[%506, %c0_78] : memref<128x48xf32, #tpu.memory_space<vmem>>, vector<8x48xf32>
    %508 = arith.truncf %493 : vector<8x16xf32> to vector<8x16xbf16>
    %cst_79 = arith.constant dense<0.000000e+00> : vector<8x48xf32>
    %509 = tpu.matmul %508, %7, %cst_79 {dimension_numbers = #tpu.dot_dimension_numbers<[1], [0], [0], [1], [0, 0, 1, 1], [], []>} : vector<8x16xbf16>, vector<16x48xbf16>, vector<8x48xf32> -> vector<8x48xf32>
    %510 = vector.broadcast %8 : vector<1x48xf32> to vector<8x48xf32>
    %511 = arith.addf %509, %510 : vector<8x48xf32>
    %512 = vector.extract_strided_slice %507 {offsets = [0, 0], sizes = [8, 32], strides = [1, 1]} : vector<8x48xf32> to vector<8x32xf32>
    %513 = vector.extract_strided_slice %511 {offsets = [0, 0], sizes = [8, 32], strides = [1, 1]} : vector<8x48xf32> to vector<8x32xf32>
    %514 = arith.addf %512, %513 : vector<8x32xf32>
    %515 = arith.negf %514 : vector<8x32xf32>
    %516 = math.exp %515 : vector<8x32xf32>
    %cst_80 = arith.constant 1.000000e+00 : f32
    %517 = vector.broadcast %cst_80 : f32 to vector<8x32xf32>
    %518 = arith.addf %517, %516 : vector<8x32xf32>
    %519 = arith.divf %517, %518 : vector<8x32xf32>
    %520 = vector.extract_strided_slice %519 {offsets = [0, 0], sizes = [8, 16], strides = [1, 1]} : vector<8x32xf32> to vector<8x16xf32>
    %521 = vector.extract_strided_slice %519 {offsets = [0, 16], sizes = [8, 16], strides = [1, 1]} : vector<8x32xf32> to vector<8x16xf32>
    %522 = vector.extract_strided_slice %507 {offsets = [0, 32], sizes = [8, 16], strides = [1, 1]} : vector<8x48xf32> to vector<8x16xf32>
    %523 = vector.extract_strided_slice %511 {offsets = [0, 32], sizes = [8, 16], strides = [1, 1]} : vector<8x48xf32> to vector<8x16xf32>
    %524 = arith.mulf %520, %523 : vector<8x16xf32>
    %525 = arith.addf %522, %524 : vector<8x16xf32>
    %526 = math.tanh %525 : vector<8x16xf32>
    %cst_81 = arith.constant 1.000000e+00 : f32
    %527 = vector.broadcast %cst_81 : f32 to vector<8x16xf32>
    %528 = arith.subf %527, %521 : vector<8x16xf32>
    %529 = arith.mulf %528, %526 : vector<8x16xf32>
    %530 = arith.mulf %521, %493 : vector<8x16xf32>
    %531 = arith.addf %529, %530 : vector<8x16xf32>
    %532 = arith.index_cast %c13_i32 : i32 to index
    %533 = memref.load %arg6[%532] : memref<16xf32, #tpu.memory_space<smem>>
    %534 = vector.broadcast %533 : f32 to vector<8x16xf32>
    %535 = arith.mulf %534, %531 : vector<8x16xf32>
    %536 = arith.addf %498, %535 : vector<8x16xf32>
    %537 = arith.index_cast %c13_i32 : i32 to index
    %538 = memref.load %arg7[%537] : memref<16xf32, #tpu.memory_space<smem>>
    %539 = vector.broadcast %538 : f32 to vector<8x16xf32>
    %540 = arith.mulf %539, %531 : vector<8x16xf32>
    %541 = arith.addf %503, %540 : vector<8x16xf32>
    %c14_i32 = arith.constant 14 : i32
    %c8_i32_82 = arith.constant 8 : i32
    %542 = arith.muli %c14_i32, %c8_i32_82 : i32
    %543 = tpu.assume_multiple %542, 8 : i32
    %544 = arith.index_cast %543 : i32 to index
    %c0_83 = arith.constant 0 : index
    %545 = vector.load %arg9[%544, %c0_83] : memref<128x48xf32, #tpu.memory_space<vmem>>, vector<8x48xf32>
    %546 = arith.truncf %531 : vector<8x16xf32> to vector<8x16xbf16>
    %cst_84 = arith.constant dense<0.000000e+00> : vector<8x48xf32>
    %547 = tpu.matmul %546, %7, %cst_84 {dimension_numbers = #tpu.dot_dimension_numbers<[1], [0], [0], [1], [0, 0, 1, 1], [], []>} : vector<8x16xbf16>, vector<16x48xbf16>, vector<8x48xf32> -> vector<8x48xf32>
    %548 = vector.broadcast %8 : vector<1x48xf32> to vector<8x48xf32>
    %549 = arith.addf %547, %548 : vector<8x48xf32>
    %550 = vector.extract_strided_slice %545 {offsets = [0, 0], sizes = [8, 32], strides = [1, 1]} : vector<8x48xf32> to vector<8x32xf32>
    %551 = vector.extract_strided_slice %549 {offsets = [0, 0], sizes = [8, 32], strides = [1, 1]} : vector<8x48xf32> to vector<8x32xf32>
    %552 = arith.addf %550, %551 : vector<8x32xf32>
    %553 = arith.negf %552 : vector<8x32xf32>
    %554 = math.exp %553 : vector<8x32xf32>
    %cst_85 = arith.constant 1.000000e+00 : f32
    %555 = vector.broadcast %cst_85 : f32 to vector<8x32xf32>
    %556 = arith.addf %555, %554 : vector<8x32xf32>
    %557 = arith.divf %555, %556 : vector<8x32xf32>
    %558 = vector.extract_strided_slice %557 {offsets = [0, 0], sizes = [8, 16], strides = [1, 1]} : vector<8x32xf32> to vector<8x16xf32>
    %559 = vector.extract_strided_slice %557 {offsets = [0, 16], sizes = [8, 16], strides = [1, 1]} : vector<8x32xf32> to vector<8x16xf32>
    %560 = vector.extract_strided_slice %545 {offsets = [0, 32], sizes = [8, 16], strides = [1, 1]} : vector<8x48xf32> to vector<8x16xf32>
    %561 = vector.extract_strided_slice %549 {offsets = [0, 32], sizes = [8, 16], strides = [1, 1]} : vector<8x48xf32> to vector<8x16xf32>
    %562 = arith.mulf %558, %561 : vector<8x16xf32>
    %563 = arith.addf %560, %562 : vector<8x16xf32>
    %564 = math.tanh %563 : vector<8x16xf32>
    %cst_86 = arith.constant 1.000000e+00 : f32
    %565 = vector.broadcast %cst_86 : f32 to vector<8x16xf32>
    %566 = arith.subf %565, %559 : vector<8x16xf32>
    %567 = arith.mulf %566, %564 : vector<8x16xf32>
    %568 = arith.mulf %559, %531 : vector<8x16xf32>
    %569 = arith.addf %567, %568 : vector<8x16xf32>
    %570 = arith.index_cast %c14_i32 : i32 to index
    %571 = memref.load %arg6[%570] : memref<16xf32, #tpu.memory_space<smem>>
    %572 = vector.broadcast %571 : f32 to vector<8x16xf32>
    %573 = arith.mulf %572, %569 : vector<8x16xf32>
    %574 = arith.addf %536, %573 : vector<8x16xf32>
    %575 = arith.index_cast %c14_i32 : i32 to index
    %576 = memref.load %arg7[%575] : memref<16xf32, #tpu.memory_space<smem>>
    %577 = vector.broadcast %576 : f32 to vector<8x16xf32>
    %578 = arith.mulf %577, %569 : vector<8x16xf32>
    %579 = arith.addf %541, %578 : vector<8x16xf32>
    %c15_i32 = arith.constant 15 : i32
    %c8_i32_87 = arith.constant 8 : i32
    %580 = arith.muli %c15_i32, %c8_i32_87 : i32
    %581 = tpu.assume_multiple %580, 8 : i32
    %582 = arith.index_cast %581 : i32 to index
    %c0_88 = arith.constant 0 : index
    %583 = vector.load %arg9[%582, %c0_88] : memref<128x48xf32, #tpu.memory_space<vmem>>, vector<8x48xf32>
    %584 = arith.truncf %569 : vector<8x16xf32> to vector<8x16xbf16>
    %cst_89 = arith.constant dense<0.000000e+00> : vector<8x48xf32>
    %585 = tpu.matmul %584, %7, %cst_89 {dimension_numbers = #tpu.dot_dimension_numbers<[1], [0], [0], [1], [0, 0, 1, 1], [], []>} : vector<8x16xbf16>, vector<16x48xbf16>, vector<8x48xf32> -> vector<8x48xf32>
    %586 = vector.broadcast %8 : vector<1x48xf32> to vector<8x48xf32>
    %587 = arith.addf %585, %586 : vector<8x48xf32>
    %588 = vector.extract_strided_slice %583 {offsets = [0, 0], sizes = [8, 32], strides = [1, 1]} : vector<8x48xf32> to vector<8x32xf32>
    %589 = vector.extract_strided_slice %587 {offsets = [0, 0], sizes = [8, 32], strides = [1, 1]} : vector<8x48xf32> to vector<8x32xf32>
    %590 = arith.addf %588, %589 : vector<8x32xf32>
    %591 = arith.negf %590 : vector<8x32xf32>
    %592 = math.exp %591 : vector<8x32xf32>
    %cst_90 = arith.constant 1.000000e+00 : f32
    %593 = vector.broadcast %cst_90 : f32 to vector<8x32xf32>
    %594 = arith.addf %593, %592 : vector<8x32xf32>
    %595 = arith.divf %593, %594 : vector<8x32xf32>
    %596 = vector.extract_strided_slice %595 {offsets = [0, 0], sizes = [8, 16], strides = [1, 1]} : vector<8x32xf32> to vector<8x16xf32>
    %597 = vector.extract_strided_slice %595 {offsets = [0, 16], sizes = [8, 16], strides = [1, 1]} : vector<8x32xf32> to vector<8x16xf32>
    %598 = vector.extract_strided_slice %583 {offsets = [0, 32], sizes = [8, 16], strides = [1, 1]} : vector<8x48xf32> to vector<8x16xf32>
    %599 = vector.extract_strided_slice %587 {offsets = [0, 32], sizes = [8, 16], strides = [1, 1]} : vector<8x48xf32> to vector<8x16xf32>
    %600 = arith.mulf %596, %599 : vector<8x16xf32>
    %601 = arith.addf %598, %600 : vector<8x16xf32>
    %602 = math.tanh %601 : vector<8x16xf32>
    %cst_91 = arith.constant 1.000000e+00 : f32
    %603 = vector.broadcast %cst_91 : f32 to vector<8x16xf32>
    %604 = arith.subf %603, %597 : vector<8x16xf32>
    %605 = arith.mulf %604, %602 : vector<8x16xf32>
    %606 = arith.mulf %597, %569 : vector<8x16xf32>
    %607 = arith.addf %605, %606 : vector<8x16xf32>
    %608 = arith.index_cast %c15_i32 : i32 to index
    %609 = memref.load %arg6[%608] : memref<16xf32, #tpu.memory_space<smem>>
    %610 = vector.broadcast %609 : f32 to vector<8x16xf32>
    %611 = arith.mulf %610, %607 : vector<8x16xf32>
    %612 = arith.addf %574, %611 : vector<8x16xf32>
    %613 = arith.index_cast %c15_i32 : i32 to index
    %614 = memref.load %arg7[%613] : memref<16xf32, #tpu.memory_space<smem>>
    %615 = vector.broadcast %614 : f32 to vector<8x16xf32>
    %616 = arith.mulf %615, %607 : vector<8x16xf32>
    %617 = arith.addf %579, %616 : vector<8x16xf32>
    %c16_i32 = arith.constant 16 : i32
    %618 = vector.extract_strided_slice %612 {offsets = [0, 0], sizes = [2, 16], strides = [1, 1]} : vector<8x16xf32> to vector<2x16xf32>
    %619 = vector.extract_strided_slice %617 {offsets = [0, 0], sizes = [2, 16], strides = [1, 1]} : vector<8x16xf32> to vector<2x16xf32>
    %620 = vector.shape_cast %618 : vector<2x16xf32> to vector<2x16x1xf32>
    %621 = vector.shape_cast %619 : vector<2x16xf32> to vector<2x1x16xf32>
    %622 = vector.broadcast %620 : vector<2x16x1xf32> to vector<2x16x16xf32>
    %623 = vector.broadcast %621 : vector<2x1x16xf32> to vector<2x16x16xf32>
    %624 = arith.addf %622, %623 : vector<2x16x16xf32>
    %cst_92 = arith.constant 0.000000e+00 : f32
    %625 = vector.broadcast %cst_92 : f32 to vector<2x16x16xf32>
    %626 = arith.cmpf oge, %624, %625 : vector<2x16x16xf32>
    %cst_93 = arith.constant 0.00999999977 : f32
    %627 = vector.broadcast %cst_93 : f32 to vector<2x16x16xf32>
    %628 = arith.mulf %627, %624 : vector<2x16x16xf32>
    %629 = arith.select %626, %624, %628 : vector<2x16x16xi1>, vector<2x16x16xf32>
    %cst_94 = arith.constant dense<0xFF800000> : vector<2x16xf32>
    %630 = vector.multi_reduction <maximumf>, %629, %cst_94 [2] : vector<2x16x16xf32> to vector<2x16xf32>
    %631 = vector.shape_cast %630 : vector<2x16xf32> to vector<2x16x1xf32>
    %632 = vector.broadcast %631 : vector<2x16x1xf32> to vector<2x16x16xf32>
    %633 = arith.subf %629, %632 : vector<2x16x16xf32>
    %634 = math.exp %633 : vector<2x16x16xf32>
    %cst_95 = arith.constant dense<0.000000e+00> : vector<2x16xf32>
    %635 = vector.multi_reduction <add>, %634, %cst_95 [2] : vector<2x16x16xf32> to vector<2x16xf32>
    %636 = vector.shape_cast %635 : vector<2x16xf32> to vector<2x16x1xf32>
    %637 = vector.broadcast %636 : vector<2x16x1xf32> to vector<2x16x16xf32>
    %638 = arith.divf %634, %637 : vector<2x16x16xf32>
    %639 = vector.extract_strided_slice %638 {offsets = [0, 0, 0], sizes = [1, 16, 16], strides = [1, 1, 1]} : vector<2x16x16xf32> to vector<1x16x16xf32>
    %640 = vector.shape_cast %639 : vector<1x16x16xf32> to vector<16x16xf32>
    %641 = vector.extract_strided_slice %638 {offsets = [1, 0, 0], sizes = [1, 16, 16], strides = [1, 1, 1]} : vector<2x16x16xf32> to vector<1x16x16xf32>
    %642 = vector.shape_cast %641 : vector<1x16x16xf32> to vector<16x16xf32>
    %643 = arith.addf %640, %642 : vector<16x16xf32>
    %cst_96 = arith.constant 5.000000e-01 : f32
    %644 = vector.broadcast %cst_96 : f32 to vector<16x16xf32>
    %645 = arith.mulf %643, %644 : vector<16x16xf32>
    %646 = tpu.transpose %645, [1, 0] : vector<16x16xf32> -> vector<16x16xf32>
    %647 = arith.addf %645, %646 : vector<16x16xf32>
    %cst_97 = arith.constant 5.000000e-01 : f32
    %648 = vector.broadcast %cst_97 : f32 to vector<16x16xf32>
    %649 = arith.mulf %648, %647 : vector<16x16xf32>
    %650 = arith.truncf %649 : vector<16x16xf32> to vector<16x16xbf16>
    %c0_98 = arith.constant 0 : index
    %c0_99 = arith.constant 0 : index
    %651 = vector.load %arg1[%c0_98, %c0_99] : memref<16x192xbf16, #tpu.memory_space<vmem>>, vector<16x192xbf16>
    %cst_100 = arith.constant dense<0.000000e+00> : vector<16x192xf32>
    %652 = tpu.matmul %650, %651, %cst_100 {dimension_numbers = #tpu.dot_dimension_numbers<[1], [0], [0], [1], [0, 0, 1, 1], [], []>} : vector<16x16xbf16>, vector<16x192xbf16>, vector<16x192xf32> -> vector<16x192xf32>
    %c0_101 = arith.constant 0 : index
    %c0_102 = arith.constant 0 : index
    %653 = vector.load %arg8[%c0_101, %c0_102] : memref<16x192xf32, #tpu.memory_space<vmem>>, vector<16x192xf32>
    tpu.vector_store %arg8[%c0_101, %c0_102], %652 {strides = array<i32>} : memref<16x192xf32, #tpu.memory_space<vmem>>, vector<16x192xf32>,
    return
  }
}

</mosaic_0001>

<llo_original>
// kernel: agc_forward.1
$region0: #{agc_forward.1}
  #allocation0 [shape = 'u32[]', space=smem, size = 0x4, offset = 0x4, fixed_abs, tag = 'smem constant byte address 0x4 - core index']
  #allocation1 [shape = 'u32[144,128]{1,0:T(1,128)}', space=vmem, size = 0x12000, scoped, tag = 'internal scratch']
  #allocation2 [shape = 'f32[128,48]{1,0:T(8,128)}', space=vmem, size = 0x10000, scoped, tag = 'scratch operand']
  %s0 = inlined_call_operand.vmem [shape: bf16[128,12], index: 0, kind: input, shape index: {}]
  %s1 = inlined_call_operand.vmem [shape: bf16[16,192], index: 1, kind: input, shape index: {}]
  %s2 = inlined_call_operand.vmem [shape: bf16[12,48], index: 2, kind: input, shape index: {}]
  %s3 = inlined_call_operand.vmem [shape: bf16[16,48], index: 3, kind: input, shape index: {}]
  %s4 = inlined_call_operand.vmem [shape: f32[1,48], index: 4, kind: input, shape index: {}]
  %s5 = inlined_call_operand.vmem [shape: f32[1,48], index: 5, kind: input, shape index: {}]
  %s6 = inlined_call_operand.vmem [shape: f32[16], index: 6, kind: input, shape index: {}]
  %s7 = inlined_call_operand.vmem [shape: f32[16], index: 7, kind: input, shape index: {}]
  %s8 = inlined_call_operand.vmem [shape: f32[16,192], index: 8, kind: output, shape index: {}]
  %s9 = sld [smem:[#allocation0]]
  $region50: #{agc_forward.1} parent=0
    _
  %s11 = ssub.s32 1, %s9
  %s12 = scalar_select 0, %s11, %s9
  $region1: #{agc_forward.1} parent=0
    #allocation3 [shape = 'u8[512]{0}', space=smem, size = 0x200, scoped, tag = 'input window, operand 6, single buffered']
    #allocation4 [shape = 's32[1]{0}', space=sflag, size = 0x4, scoped, tag = 'scoped memory for agc_forward.1']
    #allocation5 [shape = 'u8[512]{0}', space=smem, size = 0x200, scoped, tag = 'input window, operand 7, single buffered']
    #allocation6 [shape = 's32[1]{0}', space=sflag, size = 0x4, scoped, tag = 'scoped memory for agc_forward.1']
    %13 = vsyncpa [#allocation4], 0
    %14 = vsyncpa [#allocation6], 0
    // Predicated region
    $region2: #{agc_forward.1} parent=1 // pred_check
      _
    $region3: #{agc_forward.1} parent=1 // pred_check_branch
      %16 = sbr.rel (0) target = $region5
    $region4: #{agc_forward.1} parent=1 // pred_region
      _
    $region5: #{agc_forward.1} parent=1 // pred_fallthru
      _
    // Predicated region
    $region6: #{agc_forward.1} parent=1 // pred_check
      _
    $region7: #{agc_forward.1} parent=1 // pred_check_branch
      %18 = sbr.rel (0) target = $region9
    $region8: #{agc_forward.1} parent=1 // pred_region
      _
    $region9: #{agc_forward.1} parent=1 // pred_fallthru
      _
    // Predicated region
    $region10: #{agc_forward.1} parent=1 // pred_check
      _
    $region11: #{agc_forward.1} parent=1 // pred_check_branch
      %20 = sbr.rel (0) target = $region13
    $region12: #{agc_forward.1} parent=1 // pred_region
      _
    $region13: #{agc_forward.1} parent=1 // pred_fallthru
      _
    // Predicated region
    $region14: #{agc_forward.1} parent=1 // pred_check
      _
    $region15: #{agc_forward.1} parent=1 // pred_check_branch
      %22 = sbr.rel (0) target = $region17
    $region16: #{agc_forward.1} parent=1 // pred_region
      _
    $region17: #{agc_forward.1} parent=1 // pred_fallthru
      _
    // Predicated region
    $region18: #{agc_forward.1} parent=1 // pred_check
      _
    $region19: #{agc_forward.1} parent=1 // pred_check_branch
      %24 = sbr.rel (0) target = $region21
    $region20: #{agc_forward.1} parent=1 // pred_region
      _
    $region21: #{agc_forward.1} parent=1 // pred_fallthru
      _
    // Predicated region
    $region22: #{agc_forward.1} parent=1 // pred_check
      _
    $region23: #{agc_forward.1} parent=1 // pred_check_branch
      %26 = sbr.rel (0) target = $region25
    $region24: #{agc_forward.1} parent=1 // pred_region
      _
    $region25: #{agc_forward.1} parent=1 // pred_fallthru
      _
    // Predicated region
    $region26: #{agc_forward.1} parent=1 // pred_check
      _
    $region27: #{agc_forward.1} parent=1 // pred_check_branch
      %28 = sbr.rel (0) target = $region29
    $region28: #{agc_forward.1} parent=1 // pred_region
      %s30 = ssub.s32 16, 16
      %31 = vsyncadd [#allocation4], %s30
      %s33 = sshll.u32 %s6, 4
      %s34 = int_to_ptr.vmem [resolvable:$true] %s33
      %36 = dma.vmem_to_smem %s34, 16, [#allocation3], [#allocation4]
    $region29: #{agc_forward.1} parent=1 // pred_fallthru
      _
    // Predicated region
    $region30: #{agc_forward.1} parent=1 // pred_check
      _
    $region31: #{agc_forward.1} parent=1 // pred_check_branch
      %38 = sbr.rel (0) target = $region33
    $region32: #{agc_forward.1} parent=1 // pred_region
      %s40 = ssub.s32 16, 16
      %41 = vsyncadd [#allocation6], %s40
      %s43 = sshll.u32 %s7, 4
      %s44 = int_to_ptr.vmem [resolvable:$true] %s43
      %46 = dma.vmem_to_smem %s44, 16, [#allocation5], [#allocation6]
    $region33: #{agc_forward.1} parent=1 // pred_fallthru
      _
    // Predicated region
    $region34: #{agc_forward.1} parent=1 // pred_check
      _
    $region35: #{agc_forward.1} parent=1 // pred_check_branch
      %48 = sbr.rel (0) target = $region37
    $region36: #{agc_forward.1} parent=1 // pred_region
      %49 = dma.done [#allocation4], 16
    $region37: #{agc_forward.1} parent=1 // pred_fallthru
      _
    // Predicated region
    $region38: #{agc_forward.1} parent=1 // pred_check
      _
    $region39: #{agc_forward.1} parent=1 // pred_check_branch
      %51 = sbr.rel (0) target = $region41
    $region40: #{agc_forward.1} parent=1 // pred_region
      %52 = dma.done [#allocation6], 16
    $region41: #{agc_forward.1} parent=1 // pred_fallthru
      _
    %53 = sfence
    %v55 = vld [vmem:[%s0] sm:$0xf]
    %v56 = vld [vmem:[%s0 + $0x4] sm:$0xf]
    %v57 = vld [vmem:[%s0 + $0x8] sm:$0xf]
    %v58 = vld [vmem:[%s0 + $0xc] sm:$0xf]
    %v59 = vld [vmem:[%s0 + $0x10] sm:$0xf]
    %v60 = vld [vmem:[%s0 + $0x14] sm:$0xf]
    %v61 = vld [vmem:[%s0 + $0x18] sm:$0xf]
    %v62 = vld [vmem:[%s0 + $0x1c] sm:$0xf]
    %v63 = vld [vmem:[%s0 + $0x20] sm:$0xf]
    %v64 = vld [vmem:[%s0 + $0x24] sm:$0xf]
    %v65 = vld [vmem:[%s0 + $0x28] sm:$0xf]
    %v66 = vld [vmem:[%s0 + $0x2c] sm:$0xf]
    %v67 = vld [vmem:[%s0 + $0x30] sm:$0xf]
    %v68 = vld [vmem:[%s0 + $0x34] sm:$0xf]
    %v69 = vld [vmem:[%s0 + $0x38] sm:$0xf]
    %v70 = vld [vmem:[%s0 + $0x3c] sm:$0xf]
    %v71 = vld [vmem:[%s2] sm:$0xf]
    %v72 = vld [vmem:[%s2 + $0x4] sm:$0x3]
    %v73 = vld [vmem:[%s4] sm:$0x1]
    %v75 = vlaneseq
    %v76 = vshrl.u32 %v75, 7
    %v77 = vsub.s32 0, %v76
    %v78 = vrot.slane %v73, %v77
    %v96 = vunpack.c.l.b16 %v55
    %v97 = vunpack.c.l.b16 %v56
    %v98 = vunpack.c.l.b16 %v57
    %v99 = vunpack.c.l.b16 %v58
    %v100 = vunpack.c.l.b16 %v59
    %v101 = vunpack.c.l.b16 %v60
    %v102 = vunpack.c.l.b16 %v61
    %v103 = vunpack.c.l.b16 %v62
    %v104 = vunpack.c.l.b16 %v63
    %v105 = vunpack.c.l.b16 %v64
    %v106 = vunpack.c.l.b16 %v65
    %v107 = vunpack.c.l.b16 %v66
    %v108 = vunpack.c.l.b16 %v67
    %v109 = vunpack.c.l.b16 %v68
    %v110 = vunpack.c.l.b16 %v69
    %v111 = vunpack.c.l.b16 %v70
    %v112 = vpack.c.b16 %v97, %v96
    %v113 = vpack.c.b16 %v99, %v98
    %v114 = vpack.c.b16 %v101, %v100
    %v115 = vpack.c.b16 %v103, %v102
    %v116 = vpack.c.b16 %v105, %v104
    %v117 = vpack.c.b16 %v107, %v106
    %v118 = vpack.c.b16 %v109, %v108
    %v119 = vpack.c.b16 %v111, %v110
    %v122 = vunpack.c.l.b16 %v71
    %v123 = vunpack.c.l.b16 %v72
    %v124 = vpack.c.b16 %v123, %v122
    %vm125 = vcmask 97280
    %v127 = vsel %vm125, %v112, 0
    %v130 = vsel %vm125, %v113, 0
    %v133 = vsel %vm125, %v114, 0
    %v136 = vsel %vm125, %v115, 0
    %v139 = vsel %vm125, %v116, 0
    %v142 = vsel %vm125, %v117, 0
    %v145 = vsel %vm125, %v118, 0
    %v148 = vsel %vm125, %v119, 0
    %vm150 = vcmask 1045504
    %v152 = vsel %vm150, %v124, 0
    %154 = vmatprep.subr.bf16.mxu0 0
    %155 = vmatpush1.bf16.msra.mxu0 0
    %156 = vmatprep.subr.bf16.mxu0 0
    %157 = vmatpush1.bf16.msra.mxu0 0
    %158 = vmatprep.subr.bf16.mxu0 0
    %159 = vmatpush1.bf16.msra.mxu0 0
    %160 = vmatprep.subr.bf16.mxu0 0
    %161 = vmatpush1.bf16.msra.mxu0 0
    %162 = vmatprep.subr.bf16.mxu0 0
    %163 = vmatpush1.bf16.msra.mxu0 0
    %164 = vmatprep.subr.bf16.mxu0 0
    %165 = vmatpush1.bf16.msra.mxu0 0
    %166 = vmatprep.subr.bf16.mxu0 0
    %167 = vmatpush1.bf16.msra.mxu0 0
    %168 = vmatprep.subr.bf16.mxu0 0
    %169 = vmatpush1.bf16.msra.mxu0 %v152
    %170 = vmatprep.subr.bf16.mxu0 0
    %171 = vmatpush2.bf16.msra.mxu0 0
    %172 = vmatprep.subr.bf16.mxu0 0
    %173 = vmatpush2.bf16.msra.mxu0 0
    %174 = vmatprep.subr.bf16.mxu0 0
    %175 = vmatpush2.bf16.msra.mxu0 0
    %176 = vmatprep.subr.bf16.mxu0 0
    %177 = vmatpush2.bf16.msra.mxu0 0
    %178 = vmatprep.subr.bf16.mxu0 0
    %179 = vmatpush2.bf16.msra.mxu0 0
    %180 = vmatprep.subr.bf16.mxu0 0
    %181 = vmatpush2.bf16.msra.mxu0 0
    %182 = vmatprep.subr.bf16.mxu0 0
    %183 = vmatpush2.bf16.msra.mxu0 0
    %184 = vmatprep.subr.bf16.mxu0 0
    %185 = vmatpush2.bf16.msra.mxu0 0
    %186 = vmatprep.mubr.bf16.mxu0 0
    %187 = vmatmul.mubr.bf16.gmra.mxu0 %v127
    %v188 = vpop.f32.mrf.mxu0
    %v189 = vadd.f32 %v78, %v188
    %v190 = vpop.f32.mrf.mxu0
    %v191 = vpop.f32.mrf.mxu0
    %v192 = vadd.f32 %v78, %v191
    %v193 = vpop.f32.mrf.mxu0
    %194 = vmatprep.mubr.bf16.mxu0 0
    %195 = vmatmul.mubr.bf16.gmra.mxu0 %v130
    %v196 = vpop.f32.mrf.mxu0
    %v197 = vadd.f32 %v78, %v196
    %v198 = vpop.f32.mrf.mxu0
    %v199 = vpop.f32.mrf.mxu0
    %v200 = vadd.f32 %v78, %v199
    %v201 = vpop.f32.mrf.mxu0
    %202 = vmatprep.mubr.bf16.mxu0 0
    %203 = vmatmul.mubr.bf16.gmra.mxu0 %v133
    %v204 = vpop.f32.mrf.mxu0
    %v205 = vadd.f32 %v78, %v204
    %v206 = vpop.f32.mrf.mxu0
    %v207 = vpop.f32.mrf.mxu0
    %v208 = vadd.f32 %v78, %v207
    %v209 = vpop.f32.mrf.mxu0
    %210 = vmatprep.mubr.bf16.mxu0 0
    %211 = vmatmul.mubr.bf16.gmra.mxu0 %v136
    %v212 = vpop.f32.mrf.mxu0
    %v213 = vadd.f32 %v78, %v212
    %v214 = vpop.f32.mrf.mxu0
    %v215 = vpop.f32.mrf.mxu0
    %v216 = vadd.f32 %v78, %v215
    %v217 = vpop.f32.mrf.mxu0
    %218 = vmatprep.mubr.bf16.mxu0 0
    %219 = vmatmul.mubr.bf16.gmra.mxu0 %v139
    %v220 = vpop.f32.mrf.mxu0
    %v221 = vadd.f32 %v78, %v220
    %v222 = vpop.f32.mrf.mxu0
    %v223 = vpop.f32.mrf.mxu0
    %v224 = vadd.f32 %v78, %v223
    %v225 = vpop.f32.mrf.mxu0
    %226 = vmatprep.mubr.bf16.mxu0 0
    %227 = vmatmul.mubr.bf16.gmra.mxu0 %v142
    %v228 = vpop.f32.mrf.mxu0
    %v229 = vadd.f32 %v78, %v228
    %v230 = vpop.f32.mrf.mxu0
    %v231 = vpop.f32.mrf.mxu0
    %v232 = vadd.f32 %v78, %v231
    %v233 = vpop.f32.mrf.mxu0
    %234 = vmatprep.mubr.bf16.mxu0 0
    %235 = vmatmul.mubr.bf16.gmra.mxu0 %v145
    %v236 = vpop.f32.mrf.mxu0
    %v237 = vadd.f32 %v78, %v236
    %v238 = vpop.f32.mrf.mxu0
    %v239 = vpop.f32.mrf.mxu0
    %v240 = vadd.f32 %v78, %v239
    %v241 = vpop.f32.mrf.mxu0
    %242 = vmatprep.mubr.bf16.mxu0 0
    %243 = vmatmul.mubr.bf16.gmra.mxu0 %v148
    %v244 = vpop.f32.mrf.mxu0
    %v245 = vadd.f32 %v78, %v244
    %v246 = vpop.f32.mrf.mxu0
    %v247 = vpop.f32.mrf.mxu0
    %v248 = vadd.f32 %v78, %v247
    %v249 = vpop.f32.mrf.mxu0
    %250 = vdwg.mxu0
    %vm251 = vcmask 392192
    %252 = vst.msk [vmem:[#allocation2] sm:$0xff] %vm251, %v189
    %253 = vst.msk [vmem:[#allocation2 + $0x8] sm:$0xff] %vm251, %v192
    %254 = vst.msk [vmem:[#allocation2 + $0x10] sm:$0xff] %vm251, %v197
    %255 = vst.msk [vmem:[#allocation2 + $0x18] sm:$0xff] %vm251, %v200
    %256 = vst.msk [vmem:[#allocation2 + $0x20] sm:$0xff] %vm251, %v205
    %257 = vst.msk [vmem:[#allocation2 + $0x28] sm:$0xff] %vm251, %v208
    %258 = vst.msk [vmem:[#allocation2 + $0x30] sm:$0xff] %vm251, %v213
    %259 = vst.msk [vmem:[#allocation2 + $0x38] sm:$0xff] %vm251, %v216
    %260 = vst.msk [vmem:[#allocation2 + $0x40] sm:$0xff] %vm251, %v221
    %261 = vst.msk [vmem:[#allocation2 + $0x48] sm:$0xff] %vm251, %v224
    %262 = vst.msk [vmem:[#allocation2 + $0x50] sm:$0xff] %vm251, %v229
    %263 = vst.msk [vmem:[#allocation2 + $0x58] sm:$0xff] %vm251, %v232
    %264 = vst.msk [vmem:[#allocation2 + $0x60] sm:$0xff] %vm251, %v237
    %265 = vst.msk [vmem:[#allocation2 + $0x68] sm:$0xff] %vm251, %v240
    %266 = vst.msk [vmem:[#allocation2 + $0x70] sm:$0xff] %vm251, %v245
    %267 = vst.msk [vmem:[#allocation2 + $0x78] sm:$0xff] %vm251, %v248
    %v268 = vld [vmem:[%s3] sm:$0xf]
    %v269 = vld [vmem:[%s3 + $0x4] sm:$0xf]
    %v270 = vld [vmem:[%s5] sm:$0x1]
    %v271 = vld [vmem:[#allocation2] sm:$0xff]
    %v273 = vlaneseq
    %v274 = vshrl.u32 %v273, 7
    %v275 = vsub.s32 0, %v274
    %v276 = vrot.slane %v270, %v275
    %v280 = vunpack.c.l.b16 %v268
    %v281 = vunpack.c.l.b16 %v269
    %v282 = vpack.c.b16 %v281, %v280
    %vm284 = vcmask 130048
    %v286 = vsel %vm284, 0, 0
    %288 = vmatprep.subr.bf16.mxu0 0
    %289 = vmatpush1.bf16.msra.mxu0 0
    %290 = vmatprep.subr.bf16.mxu0 0
    %291 = vmatpush1.bf16.msra.mxu0 0
    %292 = vmatprep.subr.bf16.mxu0 0
    %293 = vmatpush1.bf16.msra.mxu0 0
    %294 = vmatprep.subr.bf16.mxu0 0
    %295 = vmatpush1.bf16.msra.mxu0 0
    %296 = vmatprep.subr.bf16.mxu0 0
    %297 = vmatpush1.bf16.msra.mxu0 0
    %298 = vmatprep.subr.bf16.mxu0 0
    %299 = vmatpush1.bf16.msra.mxu0 0
    %300 = vmatprep.subr.bf16.mxu0 0
    %301 = vmatpush1.bf16.msra.mxu0 0
    %302 = vmatprep.subr.bf16.mxu0 0
    %303 = vmatpush1.bf16.msra.mxu0 %v282
    %304 = vmatprep.subr.bf16.mxu0 0
    %305 = vmatpush2.bf16.msra.mxu0 0
    %306 = vmatprep.subr.bf16.mxu0 0
    %307 = vmatpush2.bf16.msra.mxu0 0
    %308 = vmatprep.subr.bf16.mxu0 0
    %309 = vmatpush2.bf16.msra.mxu0 0
    %310 = vmatprep.subr.bf16.mxu0 0
    %311 = vmatpush2.bf16.msra.mxu0 0
    %312 = vmatprep.subr.bf16.mxu0 0
    %313 = vmatpush2.bf16.msra.mxu0 0
    %314 = vmatprep.subr.bf16.mxu0 0
    %315 = vmatpush2.bf16.msra.mxu0 0
    %316 = vmatprep.subr.bf16.mxu0 0
    %317 = vmatpush2.bf16.msra.mxu0 0
    %318 = vmatprep.subr.bf16.mxu0 0
    %319 = vmatpush2.bf16.msra.mxu0 0
    %320 = vmatprep.mubr.bf16.mxu0 0
    %321 = vmatmul.mubr.bf16.gmra.mxu0 %v286
    %v322 = vpop.f32.mrf.mxu0
    %v323 = vadd.f32 %v276, %v322
    %v324 = vpop.f32.mrf.mxu0
    %v325 = vpop.f32.mrf.mxu0
    %v326 = vpop.f32.mrf.mxu0
    %327 = vdwg.mxu0
    %v328 = vadd.f32 %v271, %v323
    %v329 = vxor.u32 %v328, 2147483648
    %v330 = vmul.f32 %v329, 1.442695
    %v331 = vpow.pop %v330
    %v332 = vadd.f32 %v331, 1.0
    %v333 = vrcp.pop %v332
    %v334 = vmul.f32 1.0, %v333
    %336 = vrot.lane.b32.xlu0 %v323, 96
    %v337 = vpop.permute.xlu0 %336
    %v339 = vmul.f32 %v334, %v337
    %341 = vrot.lane.b32.xlu0 %v339, 32
    %v342 = vpop.permute.xlu0 %341
    %v344 = vadd.f32 %v271, %v342
    %v345 = vtanh.pop %v344
    %v346 = vsub.f32 1.0, %v334
    %348 = vrot.lane.b32.xlu0 %v345, 112
    %v349 = vpop.permute.xlu0 %348
    %v351 = vmul.f32 %v346, %v349
    %v352 = vmul.f32 %v334, 0.0
    %v353 = vadd.f32 %v351, %v352
    %s354 = sld [smem:[#allocation3]]
    %v355 = vstv %s354
    %v356 = vmul.f32 %v355, %v353
    %v357 = vadd.f32 %v356, 0.0
    %s358 = sld [smem:[#allocation5]]
    %v359 = vstv %s358
    %v360 = vmul.f32 %v359, %v353
    %v361 = vadd.f32 %v360, 0.0
    %s362 = scalar_lea.vmem [#allocation2], 8
    %v363 = vld [vmem:[%s362] sm:$0xff]
    %v364 = vpack.c.bf16 %v353, %v353
    %366 = vrot.lane.b32.xlu0 %v364, 112
    %v367 = vpop.permute.xlu0 %366
    %v369 = vsel %vm284, %v367, 0
    %371 = vmatprep.subr.bf16.mxu0 0
    %372 = vmatpush1.bf16.msra.mxu0 0
    %373 = vmatprep.subr.bf16.mxu0 0
    %374 = vmatpush1.bf16.msra.mxu0 0
    %375 = vmatprep.subr.bf16.mxu0 0
    %376 = vmatpush1.bf16.msra.mxu0 0
    %377 = vmatprep.subr.bf16.mxu0 0
    %378 = vmatpush1.bf16.msra.mxu0 0
    %379 = vmatprep.subr.bf16.mxu0 0
    %380 = vmatpush1.bf16.msra.mxu0 0
    %381 = vmatprep.subr.bf16.mxu0 0
    %382 = vmatpush1.bf16.msra.mxu0 0
    %383 = vmatprep.subr.bf16.mxu0 0
    %384 = vmatpush1.bf16.msra.mxu0 0
    %385 = vmatprep.subr.bf16.mxu0 0
    %386 = vmatpush1.bf16.msra.mxu0 %v282
    %387 = vmatprep.subr.bf16.mxu0 0
    %388 = vmatpush2.bf16.msra.mxu0 0
    %389 = vmatprep.subr.bf16.mxu0 0
    %390 = vmatpush2.bf16.msra.mxu0 0
    %391 = vmatprep.subr.bf16.mxu0 0
    %392 = vmatpush2.bf16.msra.mxu0 0
    %393 = vmatprep.subr.bf16.mxu0 0
    %394 = vmatpush2.bf16.msra.mxu0 0
    %395 = vmatprep.subr.bf16.mxu0 0
    %396 = vmatpush2.bf16.msra.mxu0 0
    %397 = vmatprep.subr.bf16.mxu0 0
    %398 = vmatpush2.bf16.msra.mxu0 0
    %399 = vmatprep.subr.bf16.mxu0 0
    %400 = vmatpush2.bf16.msra.mxu0 0
    %401 = vmatprep.subr.bf16.mxu0 0
    %402 = vmatpush2.bf16.msra.mxu0 0
    %403 = vmatprep.mubr.bf16.mxu0 0
    %404 = vmatmul.mubr.bf16.gmra.mxu0 %v369
    %v405 = vpop.f32.mrf.mxu0
    %v406 = vadd.f32 %v276, %v405
    %v407 = vpop.f32.mrf.mxu0
    %v408 = vpop.f32.mrf.mxu0
    %v409 = vpop.f32.mrf.mxu0
    %410 = vdwg.mxu0
    %v411 = vadd.f32 %v363, %v406
    %v412 = vxor.u32 %v411, 2147483648
    %v413 = vmul.f32 %v412, 1.442695
    %v414 = vpow.pop %v413
    %v415 = vadd.f32 %v414, 1.0
    %v416 = vrcp.pop %v415
    %v417 = vmul.f32 1.0, %v416
    %419 = vrot.lane.b32.xlu0 %v406, 96
    %v420 = vpop.permute.xlu0 %419
    %v422 = vmul.f32 %v417, %v420
    %424 = vrot.lane.b32.xlu0 %v422, 32
    %v425 = vpop.permute.xlu0 %424
    %v427 = vadd.f32 %v363, %v425
    %v428 = vtanh.pop %v427
    %v429 = vsub.f32 1.0, %v417
    %431 = vrot.lane.b32.xlu0 %v428, 112
    %v432 = vpop.permute.xlu0 %431
    %v434 = vmul.f32 %v429, %v432
    %v435 = vmul.f32 %v417, %v353
    %v436 = vadd.f32 %v434, %v435
    %s437 = sld [smem:[#allocation3 + $0x1]]
    %v438 = vstv %s437
    %v439 = vmul.f32 %v438, %v436
    %v440 = vadd.f32 %v357, %v439
    %s441 = sld [smem:[#allocation5 + $0x1]]
    %v442 = vstv %s441
    %v443 = vmul.f32 %v442, %v436
    %v444 = vadd.f32 %v361, %v443
    %s445 = scalar_lea.vmem [#allocation2], 16
    %v446 = vld [vmem:[%s445] sm:$0xff]
    %v447 = vpack.c.bf16 %v436, %v436
    %449 = vrot.lane.b32.xlu0 %v447, 112
    %v450 = vpop.permute.xlu0 %449
    %v452 = vsel %vm284, %v450, 0
    %454 = vmatprep.subr.bf16.mxu0 0
    %455 = vmatpush1.bf16.msra.mxu0 0
    %456 = vmatprep.subr.bf16.mxu0 0
    %457 = vmatpush1.bf16.msra.mxu0 0
    %458 = vmatprep.subr.bf16.mxu0 0
    %459 = vmatpush1.bf16.msra.mxu0 0
    %460 = vmatprep.subr.bf16.mxu0 0
    %461 = vmatpush1.bf16.msra.mxu0 0
    %462 = vmatprep.subr.bf16.mxu0 0
    %463 = vmatpush1.bf16.msra.mxu0 0
    %464 = vmatprep.subr.bf16.mxu0 0
    %465 = vmatpush1.bf16.msra.mxu0 0
    %466 = vmatprep.subr.bf16.mxu0 0
    %467 = vmatpush1.bf16.msra.mxu0 0
    %468 = vmatprep.subr.bf16.mxu0 0
    %469 = vmatpush1.bf16.msra.mxu0 %v282
    %470 = vmatprep.subr.bf16.mxu0 0
    %471 = vmatpush2.bf16.msra.mxu0 0
    %472 = vmatprep.subr.bf16.mxu0 0
    %473 = vmatpush2.bf16.msra.mxu0 0
    %474 = vmatprep.subr.bf16.mxu0 0
    %475 = vmatpush2.bf16.msra.mxu0 0
    %476 = vmatprep.subr.bf16.mxu0 0
    %477 = vmatpush2.bf16.msra.mxu0 0
    %478 = vmatprep.subr.bf16.mxu0 0
    %479 = vmatpush2.bf16.msra.mxu0 0
    %480 = vmatprep.subr.bf16.mxu0 0
    %481 = vmatpush2.bf16.msra.mxu0 0
    %482 = vmatprep.subr.bf16.mxu0 0
    %483 = vmatpush2.bf16.msra.mxu0 0
    %484 = vmatprep.subr.bf16.mxu0 0
    %485 = vmatpush2.bf16.msra.mxu0 0
    %486 = vmatprep.mubr.bf16.mxu0 0
    %487 = vmatmul.mubr.bf16.gmra.mxu0 %v452
    %v488 = vpop.f32.mrf.mxu0
    %v489 = vadd.f32 %v276, %v488
    %v490 = vpop.f32.mrf.mxu0
    %v491 = vpop.f32.mrf.mxu0
    %v492 = vpop.f32.mrf.mxu0
    %493 = vdwg.mxu0
    %v494 = vadd.f32 %v446, %v489
    %v495 = vxor.u32 %v494, 2147483648
    %v496 = vmul.f32 %v495, 1.442695
    %v497 = vpow.pop %v496
    %v498 = vadd.f32 %v497, 1.0
    %v499 = vrcp.pop %v498
    %v500 = vmul.f32 1.0, %v499
    %502 = vrot.lane.b32.xlu0 %v489, 96
    %v503 = vpop.permute.xlu0 %502
    %v505 = vmul.f32 %v500, %v503
    %507 = vrot.lane.b32.xlu0 %v505, 32
    %v508 = vpop.permute.xlu0 %507
    %v510 = vadd.f32 %v446, %v508
    %v511 = vtanh.pop %v510
    %v512 = vsub.f32 1.0, %v500
    %514 = vrot.lane.b32.xlu0 %v511, 112
    %v515 = vpop.permute.xlu0 %514
    %v517 = vmul.f32 %v512, %v515
    %v518 = vmul.f32 %v500, %v436
    %v519 = vadd.f32 %v517, %v518
    %s520 = sld [smem:[#allocation3 + $0x2]]
    %v521 = vstv %s520
    %v522 = vmul.f32 %v521, %v519
    %v523 = vadd.f32 %v440, %v522
    %s524 = sld [smem:[#allocation5 + $0x2]]
    %v525 = vstv %s524
    %v526 = vmul.f32 %v525, %v519
    %v527 = vadd.f32 %v444, %v526
    %s528 = scalar_lea.vmem [#allocation2], 24
    %v529 = vld [vmem:[%s528] sm:$0xff]
    %v530 = vpack.c.bf16 %v519, %v519
    %532 = vrot.lane.b32.xlu0 %v530, 112
    %v533 = vpop.permute.xlu0 %532
    %v535 = vsel %vm284, %v533, 0
    %537 = vmatprep.subr.bf16.mxu0 0
    %538 = vmatpush1.bf16.msra.mxu0 0
    %539 = vmatprep.subr.bf16.mxu0 0
    %540 = vmatpush1.bf16.msra.mxu0 0
    %541 = vmatprep.subr.bf16.mxu0 0
    %542 = vmatpush1.bf16.msra.mxu0 0
    %543 = vmatprep.subr.bf16.mxu0 0
    %544 = vmatpush1.bf16.msra.mxu0 0
    %545 = vmatprep.subr.bf16.mxu0 0
    %546 = vmatpush1.bf16.msra.mxu0 0
    %547 = vmatprep.subr.bf16.mxu0 0
    %548 = vmatpush1.bf16.msra.mxu0 0
    %549 = vmatprep.subr.bf16.mxu0 0
    %550 = vmatpush1.bf16.msra.mxu0 0
    %551 = vmatprep.subr.bf16.mxu0 0
    %552 = vmatpush1.bf16.msra.mxu0 %v282
    %553 = vmatprep.subr.bf16.mxu0 0
    %554 = vmatpush2.bf16.msra.mxu0 0
    %555 = vmatprep.subr.bf16.mxu0 0
    %556 = vmatpush2.bf16.msra.mxu0 0
    %557 = vmatprep.subr.bf16.mxu0 0
    %558 = vmatpush2.bf16.msra.mxu0 0
    %559 = vmatprep.subr.bf16.mxu0 0
    %560 = vmatpush2.bf16.msra.mxu0 0
    %561 = vmatprep.subr.bf16.mxu0 0
    %562 = vmatpush2.bf16.msra.mxu0 0
    %563 = vmatprep.subr.bf16.mxu0 0
    %564 = vmatpush2.bf16.msra.mxu0 0
    %565 = vmatprep.subr.bf16.mxu0 0
    %566 = vmatpush2.bf16.msra.mxu0 0
    %567 = vmatprep.subr.bf16.mxu0 0
    %568 = vmatpush2.bf16.msra.mxu0 0
    %569 = vmatprep.mubr.bf16.mxu0 0
    %570 = vmatmul.mubr.bf16.gmra.mxu0 %v535
    %v571 = vpop.f32.mrf.mxu0
    %v572 = vadd.f32 %v276, %v571
    %v573 = vpop.f32.mrf.mxu0
    %v574 = vpop.f32.mrf.mxu0
    %v575 = vpop.f32.mrf.mxu0
    %576 = vdwg.mxu0
    %v577 = vadd.f32 %v529, %v572
    %v578 = vxor.u32 %v577, 2147483648
    %v579 = vmul.f32 %v578, 1.442695
    %v580 = vpow.pop %v579
    %v581 = vadd.f32 %v580, 1.0
    %v582 = vrcp.pop %v581
    %v583 = vmul.f32 1.0, %v582
    %585 = vrot.lane.b32.xlu0 %v572, 96
    %v586 = vpop.permute.xlu0 %585
    %v588 = vmul.f32 %v583, %v586
    %590 = vrot.lane.b32.xlu0 %v588, 32
    %v591 = vpop.permute.xlu0 %590
    %v593 = vadd.f32 %v529, %v591
    %v594 = vtanh.pop %v593
    %v595 = vsub.f32 1.0, %v583
    %597 = vrot.lane.b32.xlu0 %v594, 112
    %v598 = vpop.permute.xlu0 %597
    %v600 = vmul.f32 %v595, %v598
    %v601 = vmul.f32 %v583, %v519
    %v602 = vadd.f32 %v600, %v601
    %s603 = sld [smem:[#allocation3 + $0x3]]
    %v604 = vstv %s603
    %v605 = vmul.f32 %v604, %v602
    %v606 = vadd.f32 %v523, %v605
    %s607 = sld [smem:[#allocation5 + $0x3]]
    %v608 = vstv %s607
    %v609 = vmul.f32 %v608, %v602
    %v610 = vadd.f32 %v527, %v609
    %s611 = scalar_lea.vmem [#allocation2], 32
    %v612 = vld [vmem:[%s611] sm:$0xff]
    %v613 = vpack.c.bf16 %v602, %v602
    %615 = vrot.lane.b32.xlu0 %v613, 112
    %v616 = vpop.permute.xlu0 %615
    %v618 = vsel %vm284, %v616, 0
    %620 = vmatprep.subr.bf16.mxu0 0
    %621 = vmatpush1.bf16.msra.mxu0 0
    %622 = vmatprep.subr.bf16.mxu0 0
    %623 = vmatpush1.bf16.msra.mxu0 0
    %624 = vmatprep.subr.bf16.mxu0 0
    %625 = vmatpush1.bf16.msra.mxu0 0
    %626 = vmatprep.subr.bf16.mxu0 0
    %627 = vmatpush1.bf16.msra.mxu0 0
    %628 = vmatprep.subr.bf16.mxu0 0
    %629 = vmatpush1.bf16.msra.mxu0 0
    %630 = vmatprep.subr.bf16.mxu0 0
    %631 = vmatpush1.bf16.msra.mxu0 0
    %632 = vmatprep.subr.bf16.mxu0 0
    %633 = vmatpush1.bf16.msra.mxu0 0
    %634 = vmatprep.subr.bf16.mxu0 0
    %635 = vmatpush1.bf16.msra.mxu0 %v282
    %636 = vmatprep.subr.bf16.mxu0 0
    %637 = vmatpush2.bf16.msra.mxu0 0
    %638 = vmatprep.subr.bf16.mxu0 0
    %639 = vmatpush2.bf16.msra.mxu0 0
    %640 = vmatprep.subr.bf16.mxu0 0
    %641 = vmatpush2.bf16.msra.mxu0 0
    %642 = vmatprep.subr.bf16.mxu0 0
    %643 = vmatpush2.bf16.msra.mxu0 0
    %644 = vmatprep.subr.bf16.mxu0 0
    %645 = vmatpush2.bf16.msra.mxu0 0
    %646 = vmatprep.subr.bf16.mxu0 0
    %647 = vmatpush2.bf16.msra.mxu0 0
    %648 = vmatprep.subr.bf16.mxu0 0
    %649 = vmatpush2.bf16.msra.mxu0 0
    %650 = vmatprep.subr.bf16.mxu0 0
    %651 = vmatpush2.bf16.msra.mxu0 0
    %652 = vmatprep.mubr.bf16.mxu0 0
    %653 = vmatmul.mubr.bf16.gmra.mxu0 %v618
    %v654 = vpop.f32.mrf.mxu0
    %v655 = vadd.f32 %v276, %v654
    %v656 = vpop.f32.mrf.mxu0
    %v657 = vpop.f32.mrf.mxu0
    %v658 = vpop.f32.mrf.mxu0
    %659 = vdwg.mxu0
    %v660 = vadd.f32 %v612, %v655
    %v661 = vxor.u32 %v660, 2147483648
    %v662 = vmul.f32 %v661, 1.442695
    %v663 = vpow.pop %v662
    %v664 = vadd.f32 %v663, 1.0
    %v665 = vrcp.pop %v664
    %v666 = vmul.f32 1.0, %v665
    %668 = vrot.lane.b32.xlu0 %v655, 96
    %v669 = vpop.permute.xlu0 %668
    %v671 = vmul.f32 %v666, %v669
    %673 = vrot.lane.b32.xlu0 %v671, 32
    %v674 = vpop.permute.xlu0 %673
    %v676 = vadd.f32 %v612, %v674
    %v677 = vtanh.pop %v676
    %v678 = vsub.f32 1.0, %v666
    %680 = vrot.lane.b32.xlu0 %v677, 112
    %v681 = vpop.permute.xlu0 %680
    %v683 = vmul.f32 %v678, %v681
    %v684 = vmul.f32 %v666, %v602
    %v685 = vadd.f32 %v683, %v684
    %s686 = sld [smem:[#allocation3 + $0x4]]
    %v687 = vstv %s686
    %v688 = vmul.f32 %v687, %v685
    %v689 = vadd.f32 %v606, %v688
    %s690 = sld [smem:[#allocation5 + $0x4]]
    %v691 = vstv %s690
    %v692 = vmul.f32 %v691, %v685
    %v693 = vadd.f32 %v610, %v692
    %s694 = scalar_lea.vmem [#allocation2], 40
    %v695 = vld [vmem:[%s694] sm:$0xff]
    %v696 = vpack.c.bf16 %v685, %v685
    %698 = vrot.lane.b32.xlu0 %v696, 112
    %v699 = vpop.permute.xlu0 %698
    %v701 = vsel %vm284, %v699, 0
    %703 = vmatprep.subr.bf16.mxu0 0
    %704 = vmatpush1.bf16.msra.mxu0 0
    %705 = vmatprep.subr.bf16.mxu0 0
    %706 = vmatpush1.bf16.msra.mxu0 0
    %707 = vmatprep.subr.bf16.mxu0 0
    %708 = vmatpush1.bf16.msra.mxu0 0
    %709 = vmatprep.subr.bf16.mxu0 0
    %710 = vmatpush1.bf16.msra.mxu0 0
    %711 = vmatprep.subr.bf16.mxu0 0
    %712 = vmatpush1.bf16.msra.mxu0 0
    %713 = vmatprep.subr.bf16.mxu0 0
    %714 = vmatpush1.bf16.msra.mxu0 0
    %715 = vmatprep.subr.bf16.mxu0 0
    %716 = vmatpush1.bf16.msra.mxu0 0
    %717 = vmatprep.subr.bf16.mxu0 0
    %718 = vmatpush1.bf16.msra.mxu0 %v282
    %719 = vmatprep.subr.bf16.mxu0 0
    %720 = vmatpush2.bf16.msra.mxu0 0
    %721 = vmatprep.subr.bf16.mxu0 0
    %722 = vmatpush2.bf16.msra.mxu0 0
    %723 = vmatprep.subr.bf16.mxu0 0
    %724 = vmatpush2.bf16.msra.mxu0 0
    %725 = vmatprep.subr.bf16.mxu0 0
    %726 = vmatpush2.bf16.msra.mxu0 0
    %727 = vmatprep.subr.bf16.mxu0 0
    %728 = vmatpush2.bf16.msra.mxu0 0
    %729 = vmatprep.subr.bf16.mxu0 0
    %730 = vmatpush2.bf16.msra.mxu0 0
    %731 = vmatprep.subr.bf16.mxu0 0
    %732 = vmatpush2.bf16.msra.mxu0 0
    %733 = vmatprep.subr.bf16.mxu0 0
    %734 = vmatpush2.bf16.msra.mxu0 0
    %735 = vmatprep.mubr.bf16.mxu0 0
    %736 = vmatmul.mubr.bf16.gmra.mxu0 %v701
    %v737 = vpop.f32.mrf.mxu0
    %v738 = vadd.f32 %v276, %v737
    %v739 = vpop.f32.mrf.mxu0
    %v740 = vpop.f32.mrf.mxu0
    %v741 = vpop.f32.mrf.mxu0
    %742 = vdwg.mxu0
    %v743 = vadd.f32 %v695, %v738
    %v744 = vxor.u32 %v743, 2147483648
    %v745 = vmul.f32 %v744, 1.442695
    %v746 = vpow.pop %v745
    %v747 = vadd.f32 %v746, 1.0
    %v748 = vrcp.pop %v747
    %v749 = vmul.f32 1.0, %v748
    %751 = vrot.lane.b32.xlu0 %v738, 96
    %v752 = vpop.permute.xlu0 %751
    %v754 = vmul.f32 %v749, %v752
    %756 = vrot.lane.b32.xlu0 %v754, 32
    %v757 = vpop.permute.xlu0 %756
    %v759 = vadd.f32 %v695, %v757
    %v760 = vtanh.pop %v759
    %v761 = vsub.f32 1.0, %v749
    %763 = vrot.lane.b32.xlu0 %v760, 112
    %v764 = vpop.permute.xlu0 %763
    %v766 = vmul.f32 %v761, %v764
    %v767 = vmul.f32 %v749, %v685
    %v768 = vadd.f32 %v766, %v767
    %s769 = sld [smem:[#allocation3 + $0x5]]
    %v770 = vstv %s769
    %v771 = vmul.f32 %v770, %v768
    %v772 = vadd.f32 %v689, %v771
    %s773 = sld [smem:[#allocation5 + $0x5]]
    %v774 = vstv %s773
    %v775 = vmul.f32 %v774, %v768
    %v776 = vadd.f32 %v693, %v775
    %s777 = scalar_lea.vmem [#allocation2], 48
    %v778 = vld [vmem:[%s777] sm:$0xff]
    %v779 = vpack.c.bf16 %v768, %v768
    %781 = vrot.lane.b32.xlu0 %v779, 112
    %v782 = vpop.permute.xlu0 %781
    %v784 = vsel %vm284, %v782, 0
    %786 = vmatprep.subr.bf16.mxu0 0
    %787 = vmatpush1.bf16.msra.mxu0 0
    %788 = vmatprep.subr.bf16.mxu0 0
    %789 = vmatpush1.bf16.msra.mxu0 0
    %790 = vmatprep.subr.bf16.mxu0 0
    %791 = vmatpush1.bf16.msra.mxu0 0
    %792 = vmatprep.subr.bf16.mxu0 0
    %793 = vmatpush1.bf16.msra.mxu0 0
    %794 = vmatprep.subr.bf16.mxu0 0
    %795 = vmatpush1.bf16.msra.mxu0 0
    %796 = vmatprep.subr.bf16.mxu0 0
    %797 = vmatpush1.bf16.msra.mxu0 0
    %798 = vmatprep.subr.bf16.mxu0 0
    %799 = vmatpush1.bf16.msra.mxu0 0
    %800 = vmatprep.subr.bf16.mxu0 0
    %801 = vmatpush1.bf16.msra.mxu0 %v282
    %802 = vmatprep.subr.bf16.mxu0 0
    %803 = vmatpush2.bf16.msra.mxu0 0
    %804 = vmatprep.subr.bf16.mxu0 0
    %805 = vmatpush2.bf16.msra.mxu0 0
    %806 = vmatprep.subr.bf16.mxu0 0
    %807 = vmatpush2.bf16.msra.mxu0 0
    %808 = vmatprep.subr.bf16.mxu0 0
    %809 = vmatpush2.bf16.msra.mxu0 0
    %810 = vmatprep.subr.bf16.mxu0 0
    %811 = vmatpush2.bf16.msra.mxu0 0
    %812 = vmatprep.subr.bf16.mxu0 0
    %813 = vmatpush2.bf16.msra.mxu0 0
    %814 = vmatprep.subr.bf16.mxu0 0
    %815 = vmatpush2.bf16.msra.mxu0 0
    %816 = vmatprep.subr.bf16.mxu0 0
    %817 = vmatpush2.bf16.msra.mxu0 0
    %818 = vmatprep.mubr.bf16.mxu0 0
    %819 = vmatmul.mubr.bf16.gmra.mxu0 %v784
    %v820 = vpop.f32.mrf.mxu0
    %v821 = vadd.f32 %v276, %v820
    %v822 = vpop.f32.mrf.mxu0
    %v823 = vpop.f32.mrf.mxu0
    %v824 = vpop.f32.mrf.mxu0
    %825 = vdwg.mxu0
    %v826 = vadd.f32 %v778, %v821
    %v827 = vxor.u32 %v826, 2147483648
    %v828 = vmul.f32 %v827, 1.442695
    %v829 = vpow.pop %v828
    %v830 = vadd.f32 %v829, 1.0
    %v831 = vrcp.pop %v830
    %v832 = vmul.f32 1.0, %v831
    %834 = vrot.lane.b32.xlu0 %v821, 96
    %v835 = vpop.permute.xlu0 %834
    %v837 = vmul.f32 %v832, %v835
    %839 = vrot.lane.b32.xlu0 %v837, 32
    %v840 = vpop.permute.xlu0 %839
    %v842 = vadd.f32 %v778, %v840
    %v843 = vtanh.pop %v842
    %v844 = vsub.f32 1.0, %v832
    %846 = vrot.lane.b32.xlu0 %v843, 112
    %v847 = vpop.permute.xlu0 %846
    %v849 = vmul.f32 %v844, %v847
    %v850 = vmul.f32 %v832, %v768
    %v851 = vadd.f32 %v849, %v850
    %s852 = sld [smem:[#allocation3 + $0x6]]
    %v853 = vstv %s852
    %v854 = vmul.f32 %v853, %v851
    %v855 = vadd.f32 %v772, %v854
    %s856 = sld [smem:[#allocation5 + $0x6]]
    %v857 = vstv %s856
    %v858 = vmul.f32 %v857, %v851
    %v859 = vadd.f32 %v776, %v858
    %s860 = scalar_lea.vmem [#allocation2], 56
    %v861 = vld [vmem:[%s860] sm:$0xff]
    %v862 = vpack.c.bf16 %v851, %v851
    %864 = vrot.lane.b32.xlu0 %v862, 112
    %v865 = vpop.permute.xlu0 %864
    %v867 = vsel %vm284, %v865, 0
    %869 = vmatprep.subr.bf16.mxu0 0
    %870 = vmatpush1.bf16.msra.mxu0 0
    %871 = vmatprep.subr.bf16.mxu0 0
    %872 = vmatpush1.bf16.msra.mxu0 0
    %873 = vmatprep.subr.bf16.mxu0 0
    %874 = vmatpush1.bf16.msra.mxu0 0
    %875 = vmatprep.subr.bf16.mxu0 0
    %876 = vmatpush1.bf16.msra.mxu0 0
    %877 = vmatprep.subr.bf16.mxu0 0
    %878 = vmatpush1.bf16.msra.mxu0 0
    %879 = vmatprep.subr.bf16.mxu0 0
    %880 = vmatpush1.bf16.msra.mxu0 0
    %881 = vmatprep.subr.bf16.mxu0 0
    %882 = vmatpush1.bf16.msra.mxu0 0
    %883 = vmatprep.subr.bf16.mxu0 0
    %884 = vmatpush1.bf16.msra.mxu0 %v282
    %885 = vmatprep.subr.bf16.mxu0 0
    %886 = vmatpush2.bf16.msra.mxu0 0
    %887 = vmatprep.subr.bf16.mxu0 0
    %888 = vmatpush2.bf16.msra.mxu0 0
    %889 = vmatprep.subr.bf16.mxu0 0
    %890 = vmatpush2.bf16.msra.mxu0 0
    %891 = vmatprep.subr.bf16.mxu0 0
    %892 = vmatpush2.bf16.msra.mxu0 0
    %893 = vmatprep.subr.bf16.mxu0 0
    %894 = vmatpush2.bf16.msra.mxu0 0
    %895 = vmatprep.subr.bf16.mxu0 0
    %896 = vmatpush2.bf16.msra.mxu0 0
    %897 = vmatprep.subr.bf16.mxu0 0
    %898 = vmatpush2.bf16.msra.mxu0 0
    %899 = vmatprep.subr.bf16.mxu0 0
    %900 = vmatpush2.bf16.msra.mxu0 0
    %901 = vmatprep.mubr.bf16.mxu0 0
    %902 = vmatmul.mubr.bf16.gmra.mxu0 %v867
    %v903 = vpop.f32.mrf.mxu0
    %v904 = vadd.f32 %v276, %v903
    %v905 = vpop.f32.mrf.mxu0
    %v906 = vpop.f32.mrf.mxu0
    %v907 = vpop.f32.mrf.mxu0
    %908 = vdwg.mxu0
    %v909 = vadd.f32 %v861, %v904
    %v910 = vxor.u32 %v909, 2147483648
    %v911 = vmul.f32 %v910, 1.442695
    %v912 = vpow.pop %v911
    %v913 = vadd.f32 %v912, 1.0
    %v914 = vrcp.pop %v913
    %v915 = vmul.f32 1.0, %v914
    %917 = vrot.lane.b32.xlu0 %v904, 96
    %v918 = vpop.permute.xlu0 %917
    %v920 = vmul.f32 %v915, %v918
    %922 = vrot.lane.b32.xlu0 %v920, 32
    %v923 = vpop.permute.xlu0 %922
    %v925 = vadd.f32 %v861, %v923
    %v926 = vtanh.pop %v925
    %v927 = vsub.f32 1.0, %v915
    %929 = vrot.lane.b32.xlu0 %v926, 112
    %v930 = vpop.permute.xlu0 %929
    %v932 = vmul.f32 %v927, %v930
    %v933 = vmul.f32 %v915, %v851
    %v934 = vadd.f32 %v932, %v933
    %s935 = sld [smem:[#allocation3 + $0x7]]
    %v936 = vstv %s935
    %v937 = vmul.f32 %v936, %v934
    %v938 = vadd.f32 %v855, %v937
    %s939 = sld [smem:[#allocation5 + $0x7]]
    %v940 = vstv %s939
    %v941 = vmul.f32 %v940, %v934
    %v942 = vadd.f32 %v859, %v941
    %s943 = scalar_lea.vmem [#allocation2], 64
    %v944 = vld [vmem:[%s943] sm:$0xff]
    %v945 = vpack.c.bf16 %v934, %v934
    %947 = vrot.lane.b32.xlu0 %v945, 112
    %v948 = vpop.permute.xlu0 %947
    %v950 = vsel %vm284, %v948, 0
    %952 = vmatprep.subr.bf16.mxu0 0
    %953 = vmatpush1.bf16.msra.mxu0 0
    %954 = vmatprep.subr.bf16.mxu0 0
    %955 = vmatpush1.bf16.msra.mxu0 0
    %956 = vmatprep.subr.bf16.mxu0 0
    %957 = vmatpush1.bf16.msra.mxu0 0
    %958 = vmatprep.subr.bf16.mxu0 0
    %959 = vmatpush1.bf16.msra.mxu0 0
    %960 = vmatprep.subr.bf16.mxu0 0
    %961 = vmatpush1.bf16.msra.mxu0 0
    %962 = vmatprep.subr.bf16.mxu0 0
    %963 = vmatpush1.bf16.msra.mxu0 0
    %964 = vmatprep.subr.bf16.mxu0 0
    %965 = vmatpush1.bf16.msra.mxu0 0
    %966 = vmatprep.subr.bf16.mxu0 0
    %967 = vmatpush1.bf16.msra.mxu0 %v282
    %968 = vmatprep.subr.bf16.mxu0 0
    %969 = vmatpush2.bf16.msra.mxu0 0
    %970 = vmatprep.subr.bf16.mxu0 0
    %971 = vmatpush2.bf16.msra.mxu0 0
    %972 = vmatprep.subr.bf16.mxu0 0
    %973 = vmatpush2.bf16.msra.mxu0 0
    %974 = vmatprep.subr.bf16.mxu0 0
    %975 = vmatpush2.bf16.msra.mxu0 0
    %976 = vmatprep.subr.bf16.mxu0 0
    %977 = vmatpush2.bf16.msra.mxu0 0
    %978 = vmatprep.subr.bf16.mxu0 0
    %979 = vmatpush2.bf16.msra.mxu0 0
    %980 = vmatprep.subr.bf16.mxu0 0
    %981 = vmatpush2.bf16.msra.mxu0 0
    %982 = vmatprep.subr.bf16.mxu0 0
    %983 = vmatpush2.bf16.msra.mxu0 0
    %984 = vmatprep.mubr.bf16.mxu0 0
    %985 = vmatmul.mubr.bf16.gmra.mxu0 %v950
    %v986 = vpop.f32.mrf.mxu0
    %v987 = vadd.f32 %v276, %v986
    %v988 = vpop.f32.mrf.mxu0
    %v989 = vpop.f32.mrf.mxu0
    %v990 = vpop.f32.mrf.mxu0
    %991 = vdwg.mxu0
    %v992 = vadd.f32 %v944, %v987
    %v993 = vxor.u32 %v992, 2147483648
    %v994 = vmul.f32 %v993, 1.442695
    %v995 = vpow.pop %v994
    %v996 = vadd.f32 %v995, 1.0
    %v997 = vrcp.pop %v996
    %v998 = vmul.f32 1.0, %v997
    %1000 = vrot.lane.b32.xlu0 %v987, 96
    %v1001 = vpop.permute.xlu0 %1000
    %v1003 = vmul.f32 %v998, %v1001
    %1005 = vrot.lane.b32.xlu0 %v1003, 32
    %v1006 = vpop.permute.xlu0 %1005
    %v1008 = vadd.f32 %v944, %v1006
    %v1009 = vtanh.pop %v1008
    %v1010 = vsub.f32 1.0, %v998
    %1012 = vrot.lane.b32.xlu0 %v1009, 112
    %v1013 = vpop.permute.xlu0 %1012
    %v1015 = vmul.f32 %v1010, %v1013
    %v1016 = vmul.f32 %v998, %v934
    %v1017 = vadd.f32 %v1015, %v1016
    %s1018 = sld [smem:[#allocation3 + $0x8]]
    %v1019 = vstv %s1018
    %v1020 = vmul.f32 %v1019, %v1017
    %v1021 = vadd.f32 %v938, %v1020
    %s1022 = sld [smem:[#allocation5 + $0x8]]
    %v1023 = vstv %s1022
    %v1024 = vmul.f32 %v1023, %v1017
    %v1025 = vadd.f32 %v942, %v1024
    %s1026 = scalar_lea.vmem [#allocation2], 72
    %v1027 = vld [vmem:[%s1026] sm:$0xff]
    %v1028 = vpack.c.bf16 %v1017, %v1017
    %1030 = vrot.lane.b32.xlu0 %v1028, 112
    %v1031 = vpop.permute.xlu0 %1030
    %v1033 = vsel %vm284, %v1031, 0
    %1035 = vmatprep.subr.bf16.mxu0 0
    %1036 = vmatpush1.bf16.msra.mxu0 0
    %1037 = vmatprep.subr.bf16.mxu0 0
    %1038 = vmatpush1.bf16.msra.mxu0 0
    %1039 = vmatprep.subr.bf16.mxu0 0
    %1040 = vmatpush1.bf16.msra.mxu0 0
    %1041 = vmatprep.subr.bf16.mxu0 0
    %1042 = vmatpush1.bf16.msra.mxu0 0
    %1043 = vmatprep.subr.bf16.mxu0 0
    %1044 = vmatpush1.bf16.msra.mxu0 0
    %1045 = vmatprep.subr.bf16.mxu0 0
    %1046 = vmatpush1.bf16.msra.mxu0 0
    %1047 = vmatprep.subr.bf16.mxu0 0
    %1048 = vmatpush1.bf16.msra.mxu0 0
    %1049 = vmatprep.subr.bf16.mxu0 0
    %1050 = vmatpush1.bf16.msra.mxu0 %v282
    %1051 = vmatprep.subr.bf16.mxu0 0
    %1052 = vmatpush2.bf16.msra.mxu0 0
    %1053 = vmatprep.subr.bf16.mxu0 0
    %1054 = vmatpush2.bf16.msra.mxu0 0
    %1055 = vmatprep.subr.bf16.mxu0 0
    %1056 = vmatpush2.bf16.msra.mxu0 0
    %1057 = vmatprep.subr.bf16.mxu0 0
    %1058 = vmatpush2.bf16.msra.mxu0 0
    %1059 = vmatprep.subr.bf16.mxu0 0
    %1060 = vmatpush2.bf16.msra.mxu0 0
    %1061 = vmatprep.subr.bf16.mxu0 0
    %1062 = vmatpush2.bf16.msra.mxu0 0
    %1063 = vmatprep.subr.bf16.mxu0 0
    %1064 = vmatpush2.bf16.msra.mxu0 0
    %1065 = vmatprep.subr.bf16.mxu0 0
    %1066 = vmatpush2.bf16.msra.mxu0 0
    %1067 = vmatprep.mubr.bf16.mxu0 0
    %1068 = vmatmul.mubr.bf16.gmra.mxu0 %v1033
    %v1069 = vpop.f32.mrf.mxu0
    %v1070 = vadd.f32 %v276, %v1069
    %v1071 = vpop.f32.mrf.mxu0
    %v1072 = vpop.f32.mrf.mxu0
    %v1073 = vpop.f32.mrf.mxu0
    %1074 = vdwg.mxu0
    %v1075 = vadd.f32 %v1027, %v1070
    %v1076 = vxor.u32 %v1075, 2147483648
    %v1077 = vmul.f32 %v1076, 1.442695
    %v1078 = vpow.pop %v1077
    %v1079 = vadd.f32 %v1078, 1.0
    %v1080 = vrcp.pop %v1079
    %v1081 = vmul.f32 1.0, %v1080
    %1083 = vrot.lane.b32.xlu0 %v1070, 96
    %v1084 = vpop.permute.xlu0 %1083
    %v1086 = vmul.f32 %v1081, %v1084
    %1088 = vrot.lane.b32.xlu0 %v1086, 32
    %v1089 = vpop.permute.xlu0 %1088
    %v1091 = vadd.f32 %v1027, %v1089
    %v1092 = vtanh.pop %v1091
    %v1093 = vsub.f32 1.0, %v1081
    %1095 = vrot.lane.b32.xlu0 %v1092, 112
    %v1096 = vpop.permute.xlu0 %1095
    %v1098 = vmul.f32 %v1093, %v1096
    %v1099 = vmul.f32 %v1081, %v1017
    %v1100 = vadd.f32 %v1098, %v1099
    %s1101 = sld [smem:[#allocation3 + $0x9]]
    %v1102 = vstv %s1101
    %v1103 = vmul.f32 %v1102, %v1100
    %v1104 = vadd.f32 %v1021, %v1103
    %s1105 = sld [smem:[#allocation5 + $0x9]]
    %v1106 = vstv %s1105
    %v1107 = vmul.f32 %v1106, %v1100
    %v1108 = vadd.f32 %v1025, %v1107
    %s1109 = scalar_lea.vmem [#allocation2], 80
    %v1110 = vld [vmem:[%s1109] sm:$0xff]
    %v1111 = vpack.c.bf16 %v1100, %v1100
    %1113 = vrot.lane.b32.xlu0 %v1111, 112
    %v1114 = vpop.permute.xlu0 %1113
    %v1116 = vsel %vm284, %v1114, 0
    %1118 = vmatprep.subr.bf16.mxu0 0
    %1119 = vmatpush1.bf16.msra.mxu0 0
    %1120 = vmatprep.subr.bf16.mxu0 0
    %1121 = vmatpush1.bf16.msra.mxu0 0
    %1122 = vmatprep.subr.bf16.mxu0 0
    %1123 = vmatpush1.bf16.msra.mxu0 0
    %1124 = vmatprep.subr.bf16.mxu0 0
    %1125 = vmatpush1.bf16.msra.mxu0 0
    %1126 = vmatprep.subr.bf16.mxu0 0
    %1127 = vmatpush1.bf16.msra.mxu0 0
    %1128 = vmatprep.subr.bf16.mxu0 0
    %1129 = vmatpush1.bf16.msra.mxu0 0
    %1130 = vmatprep.subr.bf16.mxu0 0
    %1131 = vmatpush1.bf16.msra.mxu0 0
    %1132 = vmatprep.subr.bf16.mxu0 0
    %1133 = vmatpush1.bf16.msra.mxu0 %v282
    %1134 = vmatprep.subr.bf16.mxu0 0
    %1135 = vmatpush2.bf16.msra.mxu0 0
    %1136 = vmatprep.subr.bf16.mxu0 0
    %1137 = vmatpush2.bf16.msra.mxu0 0
    %1138 = vmatprep.subr.bf16.mxu0 0
    %1139 = vmatpush2.bf16.msra.mxu0 0
    %1140 = vmatprep.subr.bf16.mxu0 0
    %1141 = vmatpush2.bf16.msra.mxu0 0
    %1142 = vmatprep.subr.bf16.mxu0 0
    %1143 = vmatpush2.bf16.msra.mxu0 0
    %1144 = vmatprep.subr.bf16.mxu0 0
    %1145 = vmatpush2.bf16.msra.mxu0 0
    %1146 = vmatprep.subr.bf16.mxu0 0
    %1147 = vmatpush2.bf16.msra.mxu0 0
    %1148 = vmatprep.subr.bf16.mxu0 0
    %1149 = vmatpush2.bf16.msra.mxu0 0
    %1150 = vmatprep.mubr.bf16.mxu0 0
    %1151 = vmatmul.mubr.bf16.gmra.mxu0 %v1116
    %v1152 = vpop.f32.mrf.mxu0
    %v1153 = vadd.f32 %v276, %v1152
    %v1154 = vpop.f32.mrf.mxu0
    %v1155 = vpop.f32.mrf.mxu0
    %v1156 = vpop.f32.mrf.mxu0
    %1157 = vdwg.mxu0
    %v1158 = vadd.f32 %v1110, %v1153
    %v1159 = vxor.u32 %v1158, 2147483648
    %v1160 = vmul.f32 %v1159, 1.442695
    %v1161 = vpow.pop %v1160
    %v1162 = vadd.f32 %v1161, 1.0
    %v1163 = vrcp.pop %v1162
    %v1164 = vmul.f32 1.0, %v1163
    %1166 = vrot.lane.b32.xlu0 %v1153, 96
    %v1167 = vpop.permute.xlu0 %1166
    %v1169 = vmul.f32 %v1164, %v1167
    %1171 = vrot.lane.b32.xlu0 %v1169, 32
    %v1172 = vpop.permute.xlu0 %1171
    %v1174 = vadd.f32 %v1110, %v1172
    %v1175 = vtanh.pop %v1174
    %v1176 = vsub.f32 1.0, %v1164
    %1178 = vrot.lane.b32.xlu0 %v1175, 112
    %v1179 = vpop.permute.xlu0 %1178
    %v1181 = vmul.f32 %v1176, %v1179
    %v1182 = vmul.f32 %v1164, %v1100
    %v1183 = vadd.f32 %v1181, %v1182
    %s1184 = sld [smem:[#allocation3 + $0xa]]
    %v1185 = vstv %s1184
    %v1186 = vmul.f32 %v1185, %v1183
    %v1187 = vadd.f32 %v1104, %v1186
    %s1188 = sld [smem:[#allocation5 + $0xa]]
    %v1189 = vstv %s1188
    %v1190 = vmul.f32 %v1189, %v1183
    %v1191 = vadd.f32 %v1108, %v1190
    %s1192 = scalar_lea.vmem [#allocation2], 88
    %v1193 = vld [vmem:[%s1192] sm:$0xff]
    %v1194 = vpack.c.bf16 %v1183, %v1183
    %1196 = vrot.lane.b32.xlu0 %v1194, 112
    %v1197 = vpop.permute.xlu0 %1196
    %v1199 = vsel %vm284, %v1197, 0
    %1201 = vmatprep.subr.bf16.mxu0 0
    %1202 = vmatpush1.bf16.msra.mxu0 0
    %1203 = vmatprep.subr.bf16.mxu0 0
    %1204 = vmatpush1.bf16.msra.mxu0 0
    %1205 = vmatprep.subr.bf16.mxu0 0
    %1206 = vmatpush1.bf16.msra.mxu0 0
    %1207 = vmatprep.subr.bf16.mxu0 0
    %1208 = vmatpush1.bf16.msra.mxu0 0
    %1209 = vmatprep.subr.bf16.mxu0 0
    %1210 = vmatpush1.bf16.msra.mxu0 0
    %1211 = vmatprep.subr.bf16.mxu0 0
    %1212 = vmatpush1.bf16.msra.mxu0 0
    %1213 = vmatprep.subr.bf16.mxu0 0
    %1214 = vmatpush1.bf16.msra.mxu0 0
    %1215 = vmatprep.subr.bf16.mxu0 0
    %1216 = vmatpush1.bf16.msra.mxu0 %v282
    %1217 = vmatprep.subr.bf16.mxu0 0
    %1218 = vmatpush2.bf16.msra.mxu0 0
    %1219 = vmatprep.subr.bf16.mxu0 0
    %1220 = vmatpush2.bf16.msra.mxu0 0
    %1221 = vmatprep.subr.bf16.mxu0 0
    %1222 = vmatpush2.bf16.msra.mxu0 0
    %1223 = vmatprep.subr.bf16.mxu0 0
    %1224 = vmatpush2.bf16.msra.mxu0 0
    %1225 = vmatprep.subr.bf16.mxu0 0
    %1226 = vmatpush2.bf16.msra.mxu0 0
    %1227 = vmatprep.subr.bf16.mxu0 0
    %1228 = vmatpush2.bf16.msra.mxu0 0
    %1229 = vmatprep.subr.bf16.mxu0 0
    %1230 = vmatpush2.bf16.msra.mxu0 0
    %1231 = vmatprep.subr.bf16.mxu0 0
    %1232 = vmatpush2.bf16.msra.mxu0 0
    %1233 = vmatprep.mubr.bf16.mxu0 0
    %1234 = vmatmul.mubr.bf16.gmra.mxu0 %v1199
    %v1235 = vpop.f32.mrf.mxu0
    %v1236 = vadd.f32 %v276, %v1235
    %v1237 = vpop.f32.mrf.mxu0
    %v1238 = vpop.f32.mrf.mxu0
    %v1239 = vpop.f32.mrf.mxu0
    %1240 = vdwg.mxu0
    %v1241 = vadd.f32 %v1193, %v1236
    %v1242 = vxor.u32 %v1241, 2147483648
    %v1243 = vmul.f32 %v1242, 1.442695
    %v1244 = vpow.pop %v1243
    %v1245 = vadd.f32 %v1244, 1.0
    %v1246 = vrcp.pop %v1245
    %v1247 = vmul.f32 1.0, %v1246
    %1249 = vrot.lane.b32.xlu0 %v1236, 96
    %v1250 = vpop.permute.xlu0 %1249
    %v1252 = vmul.f32 %v1247, %v1250
    %1254 = vrot.lane.b32.xlu0 %v1252, 32
    %v1255 = vpop.permute.xlu0 %1254
    %v1257 = vadd.f32 %v1193, %v1255
    %v1258 = vtanh.pop %v1257
    %v1259 = vsub.f32 1.0, %v1247
    %1261 = vrot.lane.b32.xlu0 %v1258, 112
    %v1262 = vpop.permute.xlu0 %1261
    %v1264 = vmul.f32 %v1259, %v1262
    %v1265 = vmul.f32 %v1247, %v1183
    %v1266 = vadd.f32 %v1264, %v1265
    %s1267 = sld [smem:[#allocation3 + $0xb]]
    %v1268 = vstv %s1267
    %v1269 = vmul.f32 %v1268, %v1266
    %v1270 = vadd.f32 %v1187, %v1269
    %s1271 = sld [smem:[#allocation5 + $0xb]]
    %v1272 = vstv %s1271
    %v1273 = vmul.f32 %v1272, %v1266
    %v1274 = vadd.f32 %v1191, %v1273
    %s1275 = scalar_lea.vmem [#allocation2], 96
    %v1276 = vld [vmem:[%s1275] sm:$0xff]
    %v1277 = vpack.c.bf16 %v1266, %v1266
    %1279 = vrot.lane.b32.xlu0 %v1277, 112
    %v1280 = vpop.permute.xlu0 %1279
    %v1282 = vsel %vm284, %v1280, 0
    %1284 = vmatprep.subr.bf16.mxu0 0
    %1285 = vmatpush1.bf16.msra.mxu0 0
    %1286 = vmatprep.subr.bf16.mxu0 0
    %1287 = vmatpush1.bf16.msra.mxu0 0
    %1288 = vmatprep.subr.bf16.mxu0 0
    %1289 = vmatpush1.bf16.msra.mxu0 0
    %1290 = vmatprep.subr.bf16.mxu0 0
    %1291 = vmatpush1.bf16.msra.mxu0 0
    %1292 = vmatprep.subr.bf16.mxu0 0
    %1293 = vmatpush1.bf16.msra.mxu0 0
    %1294 = vmatprep.subr.bf16.mxu0 0
    %1295 = vmatpush1.bf16.msra.mxu0 0
    %1296 = vmatprep.subr.bf16.mxu0 0
    %1297 = vmatpush1.bf16.msra.mxu0 0
    %1298 = vmatprep.subr.bf16.mxu0 0
    %1299 = vmatpush1.bf16.msra.mxu0 %v282
    %1300 = vmatprep.subr.bf16.mxu0 0
    %1301 = vmatpush2.bf16.msra.mxu0 0
    %1302 = vmatprep.subr.bf16.mxu0 0
    %1303 = vmatpush2.bf16.msra.mxu0 0
    %1304 = vmatprep.subr.bf16.mxu0 0
    %1305 = vmatpush2.bf16.msra.mxu0 0
    %1306 = vmatprep.subr.bf16.mxu0 0
    %1307 = vmatpush2.bf16.msra.mxu0 0
    %1308 = vmatprep.subr.bf16.mxu0 0
    %1309 = vmatpush2.bf16.msra.mxu0 0
    %1310 = vmatprep.subr.bf16.mxu0 0
    %1311 = vmatpush2.bf16.msra.mxu0 0
    %1312 = vmatprep.subr.bf16.mxu0 0
    %1313 = vmatpush2.bf16.msra.mxu0 0
    %1314 = vmatprep.subr.bf16.mxu0 0
    %1315 = vmatpush2.bf16.msra.mxu0 0
    %1316 = vmatprep.mubr.bf16.mxu0 0
    %1317 = vmatmul.mubr.bf16.gmra.mxu0 %v1282
    %v1318 = vpop.f32.mrf.mxu0
    %v1319 = vadd.f32 %v276, %v1318
    %v1320 = vpop.f32.mrf.mxu0
    %v1321 = vpop.f32.mrf.mxu0
    %v1322 = vpop.f32.mrf.mxu0
    %1323 = vdwg.mxu0
    %v1324 = vadd.f32 %v1276, %v1319
    %v1325 = vxor.u32 %v1324, 2147483648
    %v1326 = vmul.f32 %v1325, 1.442695
    %v1327 = vpow.pop %v1326
    %v1328 = vadd.f32 %v1327, 1.0
    %v1329 = vrcp.pop %v1328
    %v1330 = vmul.f32 1.0, %v1329
    %1332 = vrot.lane.b32.xlu0 %v1319, 96
    %v1333 = vpop.permute.xlu0 %1332
    %v1335 = vmul.f32 %v1330, %v1333
    %1337 = vrot.lane.b32.xlu0 %v1335, 32
    %v1338 = vpop.permute.xlu0 %1337
    %v1340 = vadd.f32 %v1276, %v1338
    %v1341 = vtanh.pop %v1340
    %v1342 = vsub.f32 1.0, %v1330
    %1344 = vrot.lane.b32.xlu0 %v1341, 112
    %v1345 = vpop.permute.xlu0 %1344
    %v1347 = vmul.f32 %v1342, %v1345
    %v1348 = vmul.f32 %v1330, %v1266
    %v1349 = vadd.f32 %v1347, %v1348
    %s1350 = sld [smem:[#allocation3 + $0xc]]
    %v1351 = vstv %s1350
    %v1352 = vmul.f32 %v1351, %v1349
    %v1353 = vadd.f32 %v1270, %v1352
    %s1354 = sld [smem:[#allocation5 + $0xc]]
    %v1355 = vstv %s1354
    %v1356 = vmul.f32 %v1355, %v1349
    %v1357 = vadd.f32 %v1274, %v1356
    %s1358 = scalar_lea.vmem [#allocation2], 104
    %v1359 = vld [vmem:[%s1358] sm:$0xff]
    %v1360 = vpack.c.bf16 %v1349, %v1349
    %1362 = vrot.lane.b32.xlu0 %v1360, 112
    %v1363 = vpop.permute.xlu0 %1362
    %v1365 = vsel %vm284, %v1363, 0
    %1367 = vmatprep.subr.bf16.mxu0 0
    %1368 = vmatpush1.bf16.msra.mxu0 0
    %1369 = vmatprep.subr.bf16.mxu0 0
    %1370 = vmatpush1.bf16.msra.mxu0 0
    %1371 = vmatprep.subr.bf16.mxu0 0
    %1372 = vmatpush1.bf16.msra.mxu0 0
    %1373 = vmatprep.subr.bf16.mxu0 0
    %1374 = vmatpush1.bf16.msra.mxu0 0
    %1375 = vmatprep.subr.bf16.mxu0 0
    %1376 = vmatpush1.bf16.msra.mxu0 0
    %1377 = vmatprep.subr.bf16.mxu0 0
    %1378 = vmatpush1.bf16.msra.mxu0 0
    %1379 = vmatprep.subr.bf16.mxu0 0
    %1380 = vmatpush1.bf16.msra.mxu0 0
    %1381 = vmatprep.subr.bf16.mxu0 0
    %1382 = vmatpush1.bf16.msra.mxu0 %v282
    %1383 = vmatprep.subr.bf16.mxu0 0
    %1384 = vmatpush2.bf16.msra.mxu0 0
    %1385 = vmatprep.subr.bf16.mxu0 0
    %1386 = vmatpush2.bf16.msra.mxu0 0
    %1387 = vmatprep.subr.bf16.mxu0 0
    %1388 = vmatpush2.bf16.msra.mxu0 0
    %1389 = vmatprep.subr.bf16.mxu0 0
    %1390 = vmatpush2.bf16.msra.mxu0 0
    %1391 = vmatprep.subr.bf16.mxu0 0
    %1392 = vmatpush2.bf16.msra.mxu0 0
    %1393 = vmatprep.subr.bf16.mxu0 0
    %1394 = vmatpush2.bf16.msra.mxu0 0
    %1395 = vmatprep.subr.bf16.mxu0 0
    %1396 = vmatpush2.bf16.msra.mxu0 0
    %1397 = vmatprep.subr.bf16.mxu0 0
    %1398 = vmatpush2.bf16.msra.mxu0 0
    %1399 = vmatprep.mubr.bf16.mxu0 0
    %1400 = vmatmul.mubr.bf16.gmra.mxu0 %v1365
    %v1401 = vpop.f32.mrf.mxu0
    %v1402 = vadd.f32 %v276, %v1401
    %v1403 = vpop.f32.mrf.mxu0
    %v1404 = vpop.f32.mrf.mxu0
    %v1405 = vpop.f32.mrf.mxu0
    %1406 = vdwg.mxu0
    %v1407 = vadd.f32 %v1359, %v1402
    %v1408 = vxor.u32 %v1407, 2147483648
    %v1409 = vmul.f32 %v1408, 1.442695
    %v1410 = vpow.pop %v1409
    %v1411 = vadd.f32 %v1410, 1.0
    %v1412 = vrcp.pop %v1411
    %v1413 = vmul.f32 1.0, %v1412
    %1415 = vrot.lane.b32.xlu0 %v1402, 96
    %v1416 = vpop.permute.xlu0 %1415
    %v1418 = vmul.f32 %v1413, %v1416
    %1420 = vrot.lane.b32.xlu0 %v1418, 32
    %v1421 = vpop.permute.xlu0 %1420
    %v1423 = vadd.f32 %v1359, %v1421
    %v1424 = vtanh.pop %v1423
    %v1425 = vsub.f32 1.0, %v1413
    %1427 = vrot.lane.b32.xlu0 %v1424, 112
    %v1428 = vpop.permute.xlu0 %1427
    %v1430 = vmul.f32 %v1425, %v1428
    %v1431 = vmul.f32 %v1413, %v1349
    %v1432 = vadd.f32 %v1430, %v1431
    %s1433 = sld [smem:[#allocation3 + $0xd]]
    %v1434 = vstv %s1433
    %v1435 = vmul.f32 %v1434, %v1432
    %v1436 = vadd.f32 %v1353, %v1435
    %s1437 = sld [smem:[#allocation5 + $0xd]]
    %v1438 = vstv %s1437
    %v1439 = vmul.f32 %v1438, %v1432
    %v1440 = vadd.f32 %v1357, %v1439
    %s1441 = scalar_lea.vmem [#allocation2], 112
    %v1442 = vld [vmem:[%s1441] sm:$0xff]
    %v1443 = vpack.c.bf16 %v1432, %v1432
    %1445 = vrot.lane.b32.xlu0 %v1443, 112
    %v1446 = vpop.permute.xlu0 %1445
    %v1448 = vsel %vm284, %v1446, 0
    %1450 = vmatprep.subr.bf16.mxu0 0
    %1451 = vmatpush1.bf16.msra.mxu0 0
    %1452 = vmatprep.subr.bf16.mxu0 0
    %1453 = vmatpush1.bf16.msra.mxu0 0
    %1454 = vmatprep.subr.bf16.mxu0 0
    %1455 = vmatpush1.bf16.msra.mxu0 0
    %1456 = vmatprep.subr.bf16.mxu0 0
    %1457 = vmatpush1.bf16.msra.mxu0 0
    %1458 = vmatprep.subr.bf16.mxu0 0
    %1459 = vmatpush1.bf16.msra.mxu0 0
    %1460 = vmatprep.subr.bf16.mxu0 0
    %1461 = vmatpush1.bf16.msra.mxu0 0
    %1462 = vmatprep.subr.bf16.mxu0 0
    %1463 = vmatpush1.bf16.msra.mxu0 0
    %1464 = vmatprep.subr.bf16.mxu0 0
    %1465 = vmatpush1.bf16.msra.mxu0 %v282
    %1466 = vmatprep.subr.bf16.mxu0 0
    %1467 = vmatpush2.bf16.msra.mxu0 0
    %1468 = vmatprep.subr.bf16.mxu0 0
    %1469 = vmatpush2.bf16.msra.mxu0 0
    %1470 = vmatprep.subr.bf16.mxu0 0
    %1471 = vmatpush2.bf16.msra.mxu0 0
    %1472 = vmatprep.subr.bf16.mxu0 0
    %1473 = vmatpush2.bf16.msra.mxu0 0
    %1474 = vmatprep.subr.bf16.mxu0 0
    %1475 = vmatpush2.bf16.msra.mxu0 0
    %1476 = vmatprep.subr.bf16.mxu0 0
    %1477 = vmatpush2.bf16.msra.mxu0 0
    %1478 = vmatprep.subr.bf16.mxu0 0
    %1479 = vmatpush2.bf16.msra.mxu0 0
    %1480 = vmatprep.subr.bf16.mxu0 0
    %1481 = vmatpush2.bf16.msra.mxu0 0
    %1482 = vmatprep.mubr.bf16.mxu0 0
    %1483 = vmatmul.mubr.bf16.gmra.mxu0 %v1448
    %v1484 = vpop.f32.mrf.mxu0
    %v1485 = vadd.f32 %v276, %v1484
    %v1486 = vpop.f32.mrf.mxu0
    %v1487 = vpop.f32.mrf.mxu0
    %v1488 = vpop.f32.mrf.mxu0
    %1489 = vdwg.mxu0
    %v1490 = vadd.f32 %v1442, %v1485
    %v1491 = vxor.u32 %v1490, 2147483648
    %v1492 = vmul.f32 %v1491, 1.442695
    %v1493 = vpow.pop %v1492
    %v1494 = vadd.f32 %v1493, 1.0
    %v1495 = vrcp.pop %v1494
    %v1496 = vmul.f32 1.0, %v1495
    %1498 = vrot.lane.b32.xlu0 %v1485, 96
    %v1499 = vpop.permute.xlu0 %1498
    %v1501 = vmul.f32 %v1496, %v1499
    %1503 = vrot.lane.b32.xlu0 %v1501, 32
    %v1504 = vpop.permute.xlu0 %1503
    %v1506 = vadd.f32 %v1442, %v1504
    %v1507 = vtanh.pop %v1506
    %v1508 = vsub.f32 1.0, %v1496
    %1510 = vrot.lane.b32.xlu0 %v1507, 112
    %v1511 = vpop.permute.xlu0 %1510
    %v1513 = vmul.f32 %v1508, %v1511
    %v1514 = vmul.f32 %v1496, %v1432
    %v1515 = vadd.f32 %v1513, %v1514
    %s1516 = sld [smem:[#allocation3 + $0xe]]
    %v1517 = vstv %s1516
    %v1518 = vmul.f32 %v1517, %v1515
    %v1519 = vadd.f32 %v1436, %v1518
    %s1520 = sld [smem:[#allocation5 + $0xe]]
    %v1521 = vstv %s1520
    %v1522 = vmul.f32 %v1521, %v1515
    %v1523 = vadd.f32 %v1440, %v1522
    %s1524 = scalar_lea.vmem [#allocation2], 120
    %v1525 = vld [vmem:[%s1524] sm:$0xff]
    %v1526 = vpack.c.bf16 %v1515, %v1515
    %1528 = vrot.lane.b32.xlu0 %v1526, 112
    %v1529 = vpop.permute.xlu0 %1528
    %v1531 = vsel %vm284, %v1529, 0
    %1533 = vmatprep.subr.bf16.mxu0 0
    %1534 = vmatpush1.bf16.msra.mxu0 0
    %1535 = vmatprep.subr.bf16.mxu0 0
    %1536 = vmatpush1.bf16.msra.mxu0 0
    %1537 = vmatprep.subr.bf16.mxu0 0
    %1538 = vmatpush1.bf16.msra.mxu0 0
    %1539 = vmatprep.subr.bf16.mxu0 0
    %1540 = vmatpush1.bf16.msra.mxu0 0
    %1541 = vmatprep.subr.bf16.mxu0 0
    %1542 = vmatpush1.bf16.msra.mxu0 0
    %1543 = vmatprep.subr.bf16.mxu0 0
    %1544 = vmatpush1.bf16.msra.mxu0 0
    %1545 = vmatprep.subr.bf16.mxu0 0
    %1546 = vmatpush1.bf16.msra.mxu0 0
    %1547 = vmatprep.subr.bf16.mxu0 0
    %1548 = vmatpush1.bf16.msra.mxu0 %v282
    %1549 = vmatprep.subr.bf16.mxu0 0
    %1550 = vmatpush2.bf16.msra.mxu0 0
    %1551 = vmatprep.subr.bf16.mxu0 0
    %1552 = vmatpush2.bf16.msra.mxu0 0
    %1553 = vmatprep.subr.bf16.mxu0 0
    %1554 = vmatpush2.bf16.msra.mxu0 0
    %1555 = vmatprep.subr.bf16.mxu0 0
    %1556 = vmatpush2.bf16.msra.mxu0 0
    %1557 = vmatprep.subr.bf16.mxu0 0
    %1558 = vmatpush2.bf16.msra.mxu0 0
    %1559 = vmatprep.subr.bf16.mxu0 0
    %1560 = vmatpush2.bf16.msra.mxu0 0
    %1561 = vmatprep.subr.bf16.mxu0 0
    %1562 = vmatpush2.bf16.msra.mxu0 0
    %1563 = vmatprep.subr.bf16.mxu0 0
    %1564 = vmatpush2.bf16.msra.mxu0 0
    %1565 = vmatprep.mubr.bf16.mxu0 0
    %1566 = vmatmul.mubr.bf16.gmra.mxu0 %v1531
    %v1567 = vpop.f32.mrf.mxu0
    %v1568 = vadd.f32 %v276, %v1567
    %v1569 = vpop.f32.mrf.mxu0
    %v1570 = vpop.f32.mrf.mxu0
    %v1571 = vpop.f32.mrf.mxu0
    %1572 = vdwg.mxu0
    %v1573 = vadd.f32 %v1525, %v1568
    %v1574 = vxor.u32 %v1573, 2147483648
    %v1575 = vmul.f32 %v1574, 1.442695
    %v1576 = vpow.pop %v1575
    %v1577 = vadd.f32 %v1576, 1.0
    %v1578 = vrcp.pop %v1577
    %v1579 = vmul.f32 1.0, %v1578
    %1581 = vrot.lane.b32.xlu0 %v1568, 96
    %v1582 = vpop.permute.xlu0 %1581
    %v1584 = vmul.f32 %v1579, %v1582
    %1586 = vrot.lane.b32.xlu0 %v1584, 32
    %v1587 = vpop.permute.xlu0 %1586
    %v1589 = vadd.f32 %v1525, %v1587
    %v1590 = vtanh.pop %v1589
    %v1591 = vsub.f32 1.0, %v1579
    %1593 = vrot.lane.b32.xlu0 %v1590, 112
    %v1594 = vpop.permute.xlu0 %1593
    %v1596 = vmul.f32 %v1591, %v1594
    %v1597 = vmul.f32 %v1579, %v1515
    %v1598 = vadd.f32 %v1596, %v1597
    %s1599 = sld [smem:[#allocation3 + $0xf]]
    %v1600 = vstv %s1599
    %v1601 = vmul.f32 %v1600, %v1598
    %v1602 = vadd.f32 %v1519, %v1601
    %s1603 = sld [smem:[#allocation5 + $0xf]]
    %v1604 = vstv %s1603
    %v1605 = vmul.f32 %v1604, %v1598
    %v1606 = vadd.f32 %v1523, %v1605
    %v1607 = vlaneseq
    %v1608 = vshrl.u32 %v1607, 7
    %v1609 = vsub.s32 0, %v1608
    %v1610 = vrot.slane %v1602, %v1609
    %s1612 = sor.u32 256, 16
    %1613 = vbcast.lane.b32.xlu0 %v1610, %s1612
    %v1614 = vpop.permute.xlu0 %1613
    %s1616 = sor.u32 256, 24
    %1617 = vbcast.lane.b32.xlu0 %v1610, %s1616
    %v1618 = vpop.permute.xlu0 %1617
    %v1619 = vlaneseq
    %v1620 = vshrl.u32 %v1619, 7
    %v1621 = vsub.s32 1, %v1620
    %v1622 = vrot.slane %v1602, %v1621
    %s1624 = sor.u32 256, 16
    %1625 = vbcast.lane.b32.xlu0 %v1622, %s1624
    %v1626 = vpop.permute.xlu0 %1625
    %s1628 = sor.u32 256, 24
    %1629 = vbcast.lane.b32.xlu0 %v1622, %s1628
    %v1630 = vpop.permute.xlu0 %1629
    %v1633 = vunpack.c.l.s4 1966171168
    %v1634 = vunpack.c.0.s8 %v1633
    %v1635 = vlaneseq
    %v1636 = vshrl.u32 %v1635, 7
    %v1637 = vsub.s32 %v1634, %v1636
    %v1638 = vrot.slane %v1606, %v1637
    %v1639 = vcombine.high %v1638, %v1638
    %v1641 = vunpack.c.l.s4 1966171168
    %v1642 = vunpack.c.0.s8 %v1641
    %v1643 = vlaneseq
    %v1644 = vshrl.u32 %v1643, 7
    %v1645 = vsub.s32 %v1642, %v1644
    %v1646 = vrot.slane %v1638, %v1645
    %v1648 = vunpack.c.l.s4 1966171168
    %v1649 = vunpack.c.0.s8 %v1648
    %v1650 = vlaneseq
    %v1651 = vshrl.u32 %v1650, 7
    %v1652 = vsub.s32 %v1649, %v1651
    %v1653 = vrot.slane %v1639, %v1652
    %v1654 = vlaneseq
    %v1655 = vshrl.u32 %v1654, 7
    %v1656 = vsub.s32 0, %v1655
    %v1657 = vrot.slane %v1646, %v1656
    %v1658 = vlaneseq
    %v1659 = vshrl.u32 %v1658, 7
    %v1660 = vsub.s32 0, %v1659
    %v1661 = vrot.slane %v1653, %v1660
    %v1664 = vadd.f32 %v1614, %v1657
    %v1665 = vadd.f32 %v1618, %v1657
    %v1666 = vadd.f32 %v1626, %v1661
    %v1667 = vadd.f32 %v1630, %v1661
    %vm1668 = vcmp.ge.f32.partialorder %v1664, 0.0
    %vm1669 = vcmp.ge.f32.partialorder %v1665, 0.0
    %vm1670 = vcmp.ge.f32.partialorder %v1666, 0.0
    %vm1671 = vcmp.ge.f32.partialorder %v1667, 0.0
    %v1672 = vmul.f32 %v1664, 0.01
    %v1673 = vmul.f32 %v1665, 0.01
    %v1674 = vmul.f32 %v1666, 0.01
    %v1675 = vmul.f32 %v1667, 0.01
    %v1676 = vsel %vm1668, %v1664, %v1672
    %v1677 = vsel %vm1669, %v1665, %v1673
    %v1678 = vsel %vm1670, %v1666, %v1674
    %v1679 = vsel %vm1671, %v1667, %v1675
    %vm1680 = vcmask 261248
    %v1681 = vsel %vm1680, %v1676, -inf
    %1682 = vmax.xlane.f32.xlu0 %v1681
    %v1683 = vpop.xlane.xlu0 %1682
    %v1684 = vsel %vm1680, %v1677, -inf
    %1685 = vmax.xlane.f32.xlu0 %v1684
    %v1686 = vpop.xlane.xlu0 %1685
    %v1687 = vsel %vm1680, %v1678, -inf
    %1688 = vmax.xlane.f32.xlu0 %v1687
    %v1689 = vpop.xlane.xlu0 %1688
    %v1690 = vsel %vm1680, %v1679, -inf
    %1691 = vmax.xlane.f32.xlu0 %v1690
    %v1692 = vpop.xlane.xlu0 %1691
    %v1693 = vsub.f32 %v1676, %v1683
    %v1694 = vsub.f32 %v1677, %v1686
    %v1695 = vsub.f32 %v1678, %v1689
    %v1696 = vsub.f32 %v1679, %v1692
    %v1697 = vmul.f32 %v1693, 1.442695
    %v1698 = vpow.pop %v1697
    %v1699 = vmul.f32 %v1694, 1.442695
    %v1700 = vpow.pop %v1699
    %v1701 = vmul.f32 %v1695, 1.442695
    %v1702 = vpow.pop %v1701
    %v1703 = vmul.f32 %v1696, 1.442695
    %v1704 = vpow.pop %v1703
    %1709 = vrot.lane.b32.xlu0 %v1698, 112
    %v1710 = vpop.permute.xlu0 %1709
    %1711 = vrot.lane.b32.xlu0 %v1700, 112
    %v1712 = vpop.permute.xlu0 %1711
    %1713 = vrot.lane.b32.xlu0 %v1702, 112
    %v1714 = vpop.permute.xlu0 %1713
    %1715 = vrot.lane.b32.xlu0 %v1704, 112
    %v1716 = vpop.permute.xlu0 %1715
    %v1721 = vsel %vm284, %v1710, 0.0
    %1722 = vadd.xlane.f32.xlu0 %v1721
    %v1723 = vpop.xlane.xlu0 %1722
    %v1724 = vsel %vm284, %v1712, 0.0
    %1725 = vadd.xlane.f32.xlu0 %v1724
    %v1726 = vpop.xlane.xlu0 %1725
    %v1727 = vsel %vm284, %v1714, 0.0
    %1728 = vadd.xlane.f32.xlu0 %v1727
    %v1729 = vpop.xlane.xlu0 %1728
    %v1730 = vsel %vm284, %v1716, 0.0
    %1731 = vadd.xlane.f32.xlu0 %v1730
    %v1732 = vpop.xlane.xlu0 %1731
    %v1733 = vrcp.pop %v1723
    %v1734 = vmul.f32 %v1698, %v1733
    %v1735 = vrcp.pop %v1726
    %v1736 = vmul.f32 %v1700, %v1735
    %v1737 = vrcp.pop %v1729
    %v1738 = vmul.f32 %v1702, %v1737
    %v1739 = vrcp.pop %v1732
    %v1740 = vmul.f32 %v1704, %v1739
    %v1741 = vadd.f32 %v1734, %v1738
    %v1742 = vadd.f32 %v1736, %v1740
    %v1743 = vmul.f32 %v1741, 0.5
    %v1744 = vmul.f32 %v1742, 0.5
    %1747 = vrot.lane.b32.xlu0 %v1743, 112
    %v1748 = vpop.permute.xlu0 %1747
    %1749 = vrot.lane.b32.xlu0 %v1744, 112
    %v1750 = vpop.permute.xlu0 %1749
    %1753 = vxpose.xlu0.b32.start [1/16] %v1748, 128
    %1754 = vxpose.xlu0.b32.cont [2/16] %v1750, 128
    %1755 = vxpose.xlu0.b32.cont [3/16] 0.0, 128
    %1756 = vxpose.xlu0.b32.cont [4/16] 0.0, 128
    %1757 = vxpose.xlu0.b32.cont [5/16] 0.0, 128
    %1758 = vxpose.xlu0.b32.cont [6/16] 0.0, 128
    %1759 = vxpose.xlu0.b32.cont [7/16] 0.0, 128
    %1760 = vxpose.xlu0.b32.cont [8/16] 0.0, 128
    %1761 = vxpose.xlu0.b32.cont [9/16] 0.0, 128
    %1762 = vxpose.xlu0.b32.cont [10/16] 0.0, 128
    %1763 = vxpose.xlu0.b32.cont [11/16] 0.0, 128
    %1764 = vxpose.xlu0.b32.cont [12/16] 0.0, 128
    %1765 = vxpose.xlu0.b32.cont [13/16] 0.0, 128
    %1766 = vxpose.xlu0.b32.cont [14/16] 0.0, 128
    %1767 = vxpose.xlu0.b32.cont [15/16] 0.0, 128
    %1768 = vxpose.xlu0.b32.end [16/16] 0.0, 128
    %v1769 = vpop.trf.xlu0
    %v1770 = vpop.trf.xlu0
    %v1771 = vpop.trf.xlu0
    %v1772 = vpop.trf.xlu0
    %v1773 = vpop.trf.xlu0
    %v1774 = vpop.trf.xlu0
    %v1775 = vpop.trf.xlu0
    %v1776 = vpop.trf.xlu0
    %v1777 = vpop.trf.xlu0
    %v1778 = vpop.trf.xlu0
    %v1779 = vpop.trf.xlu0
    %v1780 = vpop.trf.xlu0
    %v1781 = vpop.trf.xlu0
    %v1782 = vpop.trf.xlu0
    %v1783 = vpop.trf.xlu0
    %v1784 = vpop.trf.xlu0
    %1787 = vrot.lane.b32.xlu0 %v1769, 16
    %v1788 = vpop.permute.xlu0 %1787
    %1789 = vrot.lane.b32.xlu0 %v1770, 16
    %v1790 = vpop.permute.xlu0 %1789
    %v1793 = vadd.f32 %v1743, %v1788
    %v1794 = vadd.f32 %v1744, %v1790
    %v1795 = vmul.f32 %v1793, 0.5
    %v1796 = vmul.f32 %v1794, 0.5
    %v1797 = vpack.c.bf16 %v1796, %v1795
    %v1798 = vld [vmem:[%s1] sm:$0xff]
    %v1799 = vld [vmem:[%s1 + $0x8] sm:$0xff]
    %1801 = vrot.lane.b32.xlu0 %v1797, 112
    %v1802 = vpop.permute.xlu0 %1801
    %v1805 = vunpack.c.l.b16 %v1798
    %v1806 = vunpack.c.h.b16 %v1798
    %v1807 = vunpack.c.l.b16 %v1799
    %v1808 = vunpack.c.h.b16 %v1799
    %v1809 = vpack.c.b16 %v1807, %v1805
    %v1810 = vpack.c.b16 %v1808, %v1806
    %v1814 = vsel %vm284, %v1802, 0
    %1816 = vmatprep.subr.bf16.mxu0 0
    %1817 = vmatpush1.bf16.msra.mxu0 0
    %1818 = vmatprep.subr.bf16.mxu0 0
    %1819 = vmatpush1.bf16.msra.mxu0 0
    %1820 = vmatprep.subr.bf16.mxu0 0
    %1821 = vmatpush1.bf16.msra.mxu0 0
    %1822 = vmatprep.subr.bf16.mxu0 0
    %1823 = vmatpush1.bf16.msra.mxu0 0
    %1824 = vmatprep.subr.bf16.mxu0 0
    %1825 = vmatpush1.bf16.msra.mxu0 0
    %1826 = vmatprep.subr.bf16.mxu0 0
    %1827 = vmatpush1.bf16.msra.mxu0 0
    %1828 = vmatprep.subr.bf16.mxu0 0
    %1829 = vmatpush1.bf16.msra.mxu0 0
    %1830 = vmatprep.subr.bf16.mxu0 %v1810
    %1831 = vmatpush1.bf16.msra.mxu0 %v1809
    %1832 = vmatprep.subr.bf16.mxu0 0
    %1833 = vmatpush2.bf16.msra.mxu0 0
    %1834 = vmatprep.subr.bf16.mxu0 0
    %1835 = vmatpush2.bf16.msra.mxu0 0
    %1836 = vmatprep.subr.bf16.mxu0 0
    %1837 = vmatpush2.bf16.msra.mxu0 0
    %1838 = vmatprep.subr.bf16.mxu0 0
    %1839 = vmatpush2.bf16.msra.mxu0 0
    %1840 = vmatprep.subr.bf16.mxu0 0
    %1841 = vmatpush2.bf16.msra.mxu0 0
    %1842 = vmatprep.subr.bf16.mxu0 0
    %1843 = vmatpush2.bf16.msra.mxu0 0
    %1844 = vmatprep.subr.bf16.mxu0 0
    %1845 = vmatpush2.bf16.msra.mxu0 0
    %1846 = vmatprep.subr.bf16.mxu0 0
    %1847 = vmatpush2.bf16.msra.mxu0 0
    %1848 = vmatprep.mubr.bf16.mxu0 0
    %1849 = vmatmul.mubr.bf16.gmra.mxu0 %v1814
    %v1850 = vpop.f32.mrf.mxu0
    %v1851 = vadd.f32 0.0, %v1850
    %v1852 = vpop.f32.mrf.mxu0
    %v1853 = vadd.f32 0.0, %v1852
    %v1854 = vpop.f32.mrf.mxu0
    %v1855 = vadd.f32 0.0, %v1854
    %v1856 = vpop.f32.mrf.mxu0
    %v1857 = vadd.f32 0.0, %v1856
    %1858 = vdwg.mxu0
    %1859 = vst [vmem:[%s8] sm:$0xff] %v1851
    %vm1860 = vcmask 523264
    %1861 = vst.msk [vmem:[%s8 + $0x8] sm:$0xff] %vm1860, %v1853
    %1862 = vst [vmem:[%s8 + $0x10] sm:$0xff] %v1855
    %1863 = vst.msk [vmem:[%s8 + $0x18] sm:$0xff] %vm1860, %v1857
    // Predicated region
    $region42: #{agc_forward.1} parent=1 // pred_check
      _
    $region43: #{agc_forward.1} parent=1 // pred_check_branch
      %1865 = sbr.rel (0) target = $region45
    $region44: #{agc_forward.1} parent=1 // pred_region
      _
    $region45: #{agc_forward.1} parent=1 // pred_fallthru
      _
    // Predicated region
    $region46: #{agc_forward.1} parent=1 // pred_check
      _
    $region47: #{agc_forward.1} parent=1 // pred_check_branch
      %1867 = sbr.rel (0) target = $region49
    $region48: #{agc_forward.1} parent=1 // pred_region
      _
    $region49: #{agc_forward.1} parent=1 // pred_fallthru
      _
    %1868 = vsyncpa [#allocation4], 1
    %1869 = vsyncpa [#allocation6], 1

</llo_original>
